<compile_context>
chip_gen: v7x
topology: tpu7x:2x2x1
jax: 0.10.0
libtpu: 0.0.40
codegen_flags: <defaults>
</compile_context>

<pallas_src>
import functools

import jax
import jax.numpy as jnp
from jax.experimental import pallas as pl
from jax.experimental.pallas import tpu as pltpu

_BF16 = jnp.bfloat16

_BLOCK_KEYS = ("ln1_g", "ln1_b", "wqkv", "bqkv", "wo", "bo",
               "ln2_g", "ln2_b", "w1", "b1", "w2", "b2")


# ----------------------------------------------------------------------------
# In-kernel helpers (pure jnp, traced inside the Pallas kernel)
# ----------------------------------------------------------------------------

def _mm(x, w):
    """bf16 MXU matmul with f32 accumulation (w is already bf16)."""
    return jnp.dot(x.astype(_BF16), w, preferred_element_type=jnp.float32)


def _layernorm(x, g, b, eps=1e-5):
    mu = jnp.mean(x, axis=-1, keepdims=True)
    var = jnp.mean(jnp.square(x - mu), axis=-1, keepdims=True)
    return (x - mu) * jax.lax.rsqrt(var + eps) * g + b


def _transformer_block(x, B, S, D,
                       ln1_g, ln1_b, wqkv, bqkv, wo, bo,
                       ln2_g, ln2_b, w1, b1, w2, b2):
    """Pre-LN single-head transformer block.  x is flat [B*S, D] float32."""
    h = _layernorm(x, ln1_g, ln1_b)
    qkv = _mm(h, wqkv) + bqkv                       # fused QKV: one (D, 3D) matmul
    # 1/sqrt(D) folded into q: touches S*D elements, not the S^2 score matrix.
    q = (qkv[:, :D] * (1.0 / (D ** 0.5))).reshape(B, S, D)
    k = qkv[:, D:2 * D].reshape(B, S, D)
    v = qkv[:, 2 * D:3 * D].reshape(B, S, D)
    # Batched attention in [B, S, D] layout (O(B*S^2), no block-diagonal mask).
    s = jnp.einsum('bqd,bkd->bqk', q.astype(_BF16), k.astype(_BF16),
                   preferred_element_type=jnp.float32)
    m = jnp.max(s, axis=-1, keepdims=True)
    p = jnp.exp(s - m)
    # NOTE: approx reciprocal (EUP slot) -- tiny numerical deviation vs exact divide.
    p = p * pl.reciprocal(jnp.sum(p, axis=-1, keepdims=True), approx=True)
    attn = jnp.einsum('bqk,bkd->bqd', p.astype(_BF16), v.astype(_BF16),
                      preferred_element_type=jnp.float32)
    x = x + (_mm(attn.reshape(B * S, D), wo) + bo)
    h = _layernorm(x, ln2_g, ln2_b)
    # TODO(synk): PyTorch nn.GELU defaults to the exact erf form; tanh approx used here.
    h = jax.nn.gelu(_mm(h, w1) + b1, approximate=True)
    return x + (_mm(h, w2) + b2)


# ----------------------------------------------------------------------------
# Single fused Pallas kernel: text encoder + visual encoder + concat/classifier
# ----------------------------------------------------------------------------

def _vqa_kernel(tok_x_ref, pos_t_ref,
                t_ln1_g, t_ln1_b, t_wqkv, t_bqkv, t_wo, t_bo,
                t_ln2_g, t_ln2_b, t_w1, t_b1, t_w2, t_b2,
                pool_w, pool_b,
                patch_ref, patch_w, patch_b, pos_v_ref,
                v_ln1_g, v_ln1_b, v_wqkv, v_bqkv, v_wo, v_bo,
                v_ln2_g, v_ln2_b, v_w1, v_b1, v_w2, v_b2,
                lnf_g, lnf_b,
                cls_w_img, cls_w_txt, cls_b,
                out_ref, *, B, S_t, S_v, D):
    # ---------------- text encoder (RoBERTa-like toy) ----------------
    # Pre-gathered token embeddings [B, S_t, D]; broadcast positional add.
    xt = tok_x_ref[...].astype(jnp.float32) + pos_t_ref[...][None, :, :]
    xt = xt.reshape(B * S_t, D)
    xt = _transformer_block(xt, B, S_t, D,
                            t_ln1_g[...], t_ln1_b[...], t_wqkv[...], t_bqkv[...],
                            t_wo[...], t_bo[...], t_ln2_g[...], t_ln2_b[...],
                            t_w1[...], t_b1[...], t_w2[...], t_b2[...])
    # Pooler: first token of each sequence -> Linear -> tanh.
    cls_tok = xt.reshape(B, S_t, D)[:, 0, :]                        # [B, D]
    text_out = jnp.tanh(_mm(cls_tok, pool_w[...]) + pool_b[...])    # [B, D]

    # ---------------- visual encoder (ViT-like toy) ----------------
    xv = _mm(patch_ref[...], patch_w[...]) + patch_b[...]           # patch embedding
    xv = xv.reshape(B, S_v, D) + pos_v_ref[...][None, :, :]         # broadcast pos add
    xv = xv.reshape(B * S_v, D)
    xv = _transformer_block(xv, B, S_v, D,
                            v_ln1_g[...], v_ln1_b[...], v_wqkv[...], v_bqkv[...],
                            v_wo[...], v_bo[...], v_ln2_g[...], v_ln2_b[...],
                            v_w1[...], v_b1[...], v_w2[...], v_b2[...])
    xv = _layernorm(xv, lnf_g[...], lnf_b[...])
    image_out = jnp.mean(xv.reshape(B, S_v, D), axis=1)             # mean pool [B, D]

    # ---------------- classifier: cat((image_out, text_out), 1) @ W + b ----------------
    # W row-split (image rows | text rows) at init -> two matmuls, no concat.
    out_ref[...] = (_mm(image_out, cls_w_img[...])
                    + _mm(text_out, cls_w_txt[...])
                    + cls_b[...])


# ----------------------------------------------------------------------------
# pallas_call wrapper (no grid: everything is whole-array resident in VMEM)
# ----------------------------------------------------------------------------

def pallas_vqa_forward(params, tok_x, patches, *, B, S_v):
    t = params["text"]
    v = params["visual"]
    S_t, D = t["pos_emb"].shape
    C = params["cls_b"].shape[1]

    inputs = [
        tok_x, t["pos_emb"],
        *[t["block"][k] for k in _BLOCK_KEYS],
        t["pool_w"], t["pool_b"],
        patches, v["patch_w"], v["patch_b"], v["pos_emb"],
        *[v["block"][k] for k in _BLOCK_KEYS],
        v["lnf_g"], v["lnf_b"],
        params["cls_w_img"], params["cls_w_txt"], params["cls_b"],
    ]
    vmem = pl.BlockSpec(memory_space=pltpu.MemorySpace.VMEM)
    return pl.pallas_call(
        functools.partial(_vqa_kernel, B=B, S_t=S_t, S_v=S_v, D=D),
        out_shape=jax.ShapeDtypeStruct((B, C), jnp.float32),
        in_specs=[vmem] * len(inputs),
        out_specs=vmem,
        compiler_params=pltpu.CompilerParams(vmem_limit_bytes=32 * 1024 * 1024),
    )(*inputs)


# ----------------------------------------------------------------------------
# Parameter init (weights bf16 for MXU, biases/LN/pos-emb f32; QKV pre-fused)
# ----------------------------------------------------------------------------

def _normal(key, shape, scale=0.02):
    return scale * jax.random.normal(key, shape, dtype=jnp.float32)


def init_transformer_block(key, d_model, d_ff):
    ks = jax.random.split(key, 6)
    wq = _normal(ks[0], (d_model, d_model))
    wk = _normal(ks[1], (d_model, d_model))
    wv = _normal(ks[2], (d_model, d_model))
    return {
        "ln1_g": jnp.ones((1, d_model), jnp.float32),
        "ln1_b": jnp.zeros((1, d_model), jnp.float32),
        "wqkv": jnp.concatenate([wq, wk, wv], axis=1).astype(_BF16),   # fused QKV
        "bqkv": jnp.zeros((1, 3 * d_model), jnp.float32),
        "wo": _normal(ks[3], (d_model, d_model)).astype(_BF16),
        "bo": jnp.zeros((1, d_model), jnp.float32),
        "ln2_g": jnp.ones((1, d_model), jnp.float32),
        "ln2_b": jnp.zeros((1, d_model), jnp.float32),
        "w1": _normal(ks[4], (d_model, d_ff)).astype(_BF16),
        "b1": jnp.zeros((1, d_ff), jnp.float32),
        "w2": _normal(ks[5], (d_ff, d_model)).astype(_BF16),
        "b2": jnp.zeros((1, d_model), jnp.float32),
    }


def init_visual_encoder(key, *, in_chans, img_size, patch, d_model, d_ff):
    num_patches = (img_size // patch) ** 2
    patch_dim = in_chans * patch * patch
    ks = jax.random.split(key, 3)
    return {
        "patch_w": _normal(ks[0], (patch_dim, d_model)).astype(_BF16),
        "patch_b": jnp.zeros((1, d_model), jnp.float32),
        "pos_emb": _normal(ks[1], (num_patches, d_model)),
        "block": init_transformer_block(ks[2], d_model, d_ff),
        "lnf_g": jnp.ones((1, d_model), jnp.float32),
        "lnf_b": jnp.zeros((1, d_model), jnp.float32),
        # NOTE: patch size deliberately NOT stored here (static config value).
    }


def init_text_encoder(key, *, vocab, seq_len, d_model, d_ff):
    ks = jax.random.split(key, 4)
    return {
        "tok_emb": _normal(ks[0], (vocab, d_model)).astype(_BF16),
        "pos_emb": _normal(ks[1], (seq_len, d_model)),
        "block": init_transformer_block(ks[2], d_model, d_ff),
        "pool_w": _normal(ks[3], (d_model, d_model)).astype(_BF16),
        "pool_b": jnp.zeros((1, d_model), jnp.float32),
    }


def init_vqa_model(key, *, in_chans, img_size, patch, vocab, seq_len,
                   d_model, d_ff, num_classes):
    ks = jax.random.split(key, 3)
    cls_w = _normal(ks[2], (2 * d_model, num_classes))
    return {
        "visual": init_visual_encoder(ks[0], in_chans=in_chans, img_size=img_size,
                                      patch=patch, d_model=d_model, d_ff=d_ff),
        "text": init_text_encoder(ks[1], vocab=vocab, seq_len=seq_len,
                                  d_model=d_model, d_ff=d_ff),
        # Classifier weight split once at init: image-feature rows | text-feature rows.
        "cls_w_img": cls_w[:d_model].astype(_BF16),
        "cls_w_txt": cls_w[d_model:].astype(_BF16),
        "cls_b": jnp.zeros((1, num_classes), jnp.float32),
    }


# ----------------------------------------------------------------------------
# Forward pass (1 pallas_call total; gather + patch extraction are XLA glue)
# ----------------------------------------------------------------------------

@functools.partial(jax.jit, static_argnames=("patch",))
def vqa_forward(params, image, answer, *, patch):
    # image layout: NCHW [B, C, H, W] (PyTorch convention); patch is a static int.
    B, C, H, W = image.shape
    p = patch
    S_v = (H // p) * (W // p)
    # Patch extraction (XLA glue): [B, C, H, W] -> [B*num_patches, C*p*p]
    patches = image.reshape(B, C, H // p, p, W // p, p)
    patches = jnp.transpose(patches, (0, 2, 4, 1, 3, 5)).reshape(B * S_v, C * p * p)
    # Token-embedding row gather as XLA glue (data-dependent gather stays outside).
    tok_x = jnp.take(params["text"]["tok_emb"], answer, axis=0)      # [B, S_t, D] bf16
    return pallas_vqa_forward(params, tok_x, patches, B=B, S_v=S_v)


# ----------------------------------------------------------------------------
# Main
# ----------------------------------------------------------------------------

if __name__ == "__main__":
    B = 2
    C_IN, IMG, PATCH = 3, 16, 4          # image: [2, 3, 16, 16] NCHW -> 16 patches
    VOCAB, SEQ = 64, 8                   # answer: [2, 8] token ids
    D_MODEL, D_FF = 32, 64
    NUM_CLASSES = 10

    key = jax.random.PRNGKey(0)
    k_params, k_img, k_txt = jax.random.split(key, 3)

    params = init_vqa_model(k_params, in_chans=C_IN, img_size=IMG, patch=PATCH,
                            vocab=VOCAB, seq_len=SEQ, d_model=D_MODEL,
                            d_ff=D_FF, num_classes=NUM_CLASSES)

    image = jax.random.normal(k_img, (B, C_IN, IMG, IMG), dtype=jnp.float32)
    answer = jax.random.randint(k_txt, (B, SEQ), 0, VOCAB, dtype=jnp.int32)

    logits = vqa_forward(params, image, answer, patch=PATCH)
    jax.block_until_ready(logits)
    assert logits.shape == (B, NUM_CLASSES)
    assert bool(jnp.all(jnp.isfinite(logits)))
    print("KERNEL_OK")
</pallas_src>

<mosaic_0001>
module attributes {stable_mosaic.version = 11 : i64} {
  func.func @_vqa_kernel(%arg0: memref<2x8x32xbf16, #tpu.memory_space<vmem>>, %arg1: memref<8x32xf32, #tpu.memory_space<vmem>>, %arg2: memref<1x32xf32, #tpu.memory_space<vmem>>, %arg3: memref<1x32xf32, #tpu.memory_space<vmem>>, %arg4: memref<32x96xbf16, #tpu.memory_space<vmem>>, %arg5: memref<1x96xf32, #tpu.memory_space<vmem>>, %arg6: memref<32x32xbf16, #tpu.memory_space<vmem>>, %arg7: memref<1x32xf32, #tpu.memory_space<vmem>>, %arg8: memref<1x32xf32, #tpu.memory_space<vmem>>, %arg9: memref<1x32xf32, #tpu.memory_space<vmem>>, %arg10: memref<32x64xbf16, #tpu.memory_space<vmem>>, %arg11: memref<1x64xf32, #tpu.memory_space<vmem>>, %arg12: memref<64x32xbf16, #tpu.memory_space<vmem>>, %arg13: memref<1x32xf32, #tpu.memory_space<vmem>>, %arg14: memref<32x32xbf16, #tpu.memory_space<vmem>>, %arg15: memref<1x32xf32, #tpu.memory_space<vmem>>, %arg16: memref<32x48xf32, #tpu.memory_space<vmem>>, %arg17: memref<48x32xbf16, #tpu.memory_space<vmem>>, %arg18: memref<1x32xf32, #tpu.memory_space<vmem>>, %arg19: memref<16x32xf32, #tpu.memory_space<vmem>>, %arg20: memref<1x32xf32, #tpu.memory_space<vmem>>, %arg21: memref<1x32xf32, #tpu.memory_space<vmem>>, %arg22: memref<32x96xbf16, #tpu.memory_space<vmem>>, %arg23: memref<1x96xf32, #tpu.memory_space<vmem>>, %arg24: memref<32x32xbf16, #tpu.memory_space<vmem>>, %arg25: memref<1x32xf32, #tpu.memory_space<vmem>>, %arg26: memref<1x32xf32, #tpu.memory_space<vmem>>, %arg27: memref<1x32xf32, #tpu.memory_space<vmem>>, %arg28: memref<32x64xbf16, #tpu.memory_space<vmem>>, %arg29: memref<1x64xf32, #tpu.memory_space<vmem>>, %arg30: memref<64x32xbf16, #tpu.memory_space<vmem>>, %arg31: memref<1x32xf32, #tpu.memory_space<vmem>>, %arg32: memref<1x32xf32, #tpu.memory_space<vmem>>, %arg33: memref<1x32xf32, #tpu.memory_space<vmem>>, %arg34: memref<32x10xbf16, #tpu.memory_space<vmem>>, %arg35: memref<32x10xbf16, #tpu.memory_space<vmem>>, %arg36: memref<1x10xf32, #tpu.memory_space<vmem>>, %arg37: memref<2x10xf32, #tpu.memory_space<vmem>>) attributes {dimension_semantics = [], scalar_prefetch = 0 : i64, scratch_operands = 0 : i64, tpu.core_type = #tpu.core_type<tc>} {
    %c0 = arith.constant 0 : index
    %c0_0 = arith.constant 0 : index
    %c0_1 = arith.constant 0 : index
    %0 = vector.load %arg0[%c0, %c0_0, %c0_1] : memref<2x8x32xbf16, #tpu.memory_space<vmem>>, vector<2x8x32xbf16>
    %1 = arith.extf %0 : vector<2x8x32xbf16> to vector<2x8x32xf32>
    %c0_2 = arith.constant 0 : index
    %c0_3 = arith.constant 0 : index
    %2 = vector.load %arg1[%c0_2, %c0_3] : memref<8x32xf32, #tpu.memory_space<vmem>>, vector<8x32xf32>
    %3 = vector.shape_cast %2 : vector<8x32xf32> to vector<1x8x32xf32>
    %4 = vector.broadcast %3 : vector<1x8x32xf32> to vector<2x8x32xf32>
    %5 = arith.addf %1, %4 : vector<2x8x32xf32>
    %6 = vector.shape_cast %5 : vector<2x8x32xf32> to vector<16x32xf32>
    %c0_4 = arith.constant 0 : index
    %c0_5 = arith.constant 0 : index
    %7 = vector.load %arg2[%c0_4, %c0_5] : memref<1x32xf32, #tpu.memory_space<vmem>>, vector<1x32xf32>
    %c0_6 = arith.constant 0 : index
    %c0_7 = arith.constant 0 : index
    %8 = vector.load %arg3[%c0_6, %c0_7] : memref<1x32xf32, #tpu.memory_space<vmem>>, vector<1x32xf32>
    %c0_8 = arith.constant 0 : index
    %c0_9 = arith.constant 0 : index
    %9 = vector.load %arg4[%c0_8, %c0_9] : memref<32x96xbf16, #tpu.memory_space<vmem>>, vector<32x96xbf16>
    %c0_10 = arith.constant 0 : index
    %c0_11 = arith.constant 0 : index
    %10 = vector.load %arg5[%c0_10, %c0_11] : memref<1x96xf32, #tpu.memory_space<vmem>>, vector<1x96xf32>
    %c0_12 = arith.constant 0 : index
    %c0_13 = arith.constant 0 : index
    %11 = vector.load %arg6[%c0_12, %c0_13] : memref<32x32xbf16, #tpu.memory_space<vmem>>, vector<32x32xbf16>
    %c0_14 = arith.constant 0 : index
    %c0_15 = arith.constant 0 : index
    %12 = vector.load %arg7[%c0_14, %c0_15] : memref<1x32xf32, #tpu.memory_space<vmem>>, vector<1x32xf32>
    %c0_16 = arith.constant 0 : index
    %c0_17 = arith.constant 0 : index
    %13 = vector.load %arg8[%c0_16, %c0_17] : memref<1x32xf32, #tpu.memory_space<vmem>>, vector<1x32xf32>
    %c0_18 = arith.constant 0 : index
    %c0_19 = arith.constant 0 : index
    %14 = vector.load %arg9[%c0_18, %c0_19] : memref<1x32xf32, #tpu.memory_space<vmem>>, vector<1x32xf32>
    %c0_20 = arith.constant 0 : index
    %c0_21 = arith.constant 0 : index
    %15 = vector.load %arg10[%c0_20, %c0_21] : memref<32x64xbf16, #tpu.memory_space<vmem>>, vector<32x64xbf16>
    %c0_22 = arith.constant 0 : index
    %c0_23 = arith.constant 0 : index
    %16 = vector.load %arg11[%c0_22, %c0_23] : memref<1x64xf32, #tpu.memory_space<vmem>>, vector<1x64xf32>
    %c0_24 = arith.constant 0 : index
    %c0_25 = arith.constant 0 : index
    %17 = vector.load %arg12[%c0_24, %c0_25] : memref<64x32xbf16, #tpu.memory_space<vmem>>, vector<64x32xbf16>
    %c0_26 = arith.constant 0 : index
    %c0_27 = arith.constant 0 : index
    %18 = vector.load %arg13[%c0_26, %c0_27] : memref<1x32xf32, #tpu.memory_space<vmem>>, vector<1x32xf32>
    %cst = arith.constant dense<0.000000e+00> : vector<16xf32>
    %19 = vector.multi_reduction <add>, %6, %cst [1] : vector<16x32xf32> to vector<16xf32>
    %20 = vector.shape_cast %19 : vector<16xf32> to vector<16x1xf32>
    %cst_28 = arith.constant 3.200000e+01 : f32
    %21 = vector.broadcast %cst_28 : f32 to vector<16x1xf32>
    %22 = arith.divf %20, %21 : vector<16x1xf32>
    %23 = vector.broadcast %22 : vector<16x1xf32> to vector<16x32xf32>
    %24 = arith.subf %6, %23 : vector<16x32xf32>
    %25 = arith.mulf %24, %24 : vector<16x32xf32>
    %cst_29 = arith.constant dense<0.000000e+00> : vector<16xf32>
    %26 = vector.multi_reduction <add>, %25, %cst_29 [1] : vector<16x32xf32> to vector<16xf32>
    %27 = vector.shape_cast %26 : vector<16xf32> to vector<16x1xf32>
    %cst_30 = arith.constant 3.200000e+01 : f32
    %28 = vector.broadcast %cst_30 : f32 to vector<16x1xf32>
    %29 = arith.divf %27, %28 : vector<16x1xf32>
    %30 = vector.broadcast %22 : vector<16x1xf32> to vector<16x32xf32>
    %31 = arith.subf %6, %30 : vector<16x32xf32>
    %cst_31 = arith.constant 9.99999974E-6 : f32
    %32 = vector.broadcast %cst_31 : f32 to vector<16x1xf32>
    %33 = arith.addf %29, %32 : vector<16x1xf32>
    %34 = math.rsqrt %33 : vector<16x1xf32>
    %35 = vector.broadcast %34 : vector<16x1xf32> to vector<16x32xf32>
    %36 = arith.mulf %31, %35 : vector<16x32xf32>
    %37 = vector.broadcast %7 : vector<1x32xf32> to vector<16x32xf32>
    %38 = arith.mulf %36, %37 : vector<16x32xf32>
    %39 = vector.broadcast %8 : vector<1x32xf32> to vector<16x32xf32>
    %40 = arith.addf %38, %39 : vector<16x32xf32>
    %41 = arith.truncf %40 : vector<16x32xf32> to vector<16x32xbf16>
    %cst_32 = arith.constant dense<0.000000e+00> : vector<16x96xf32>
    %42 = tpu.matmul %41, %9, %cst_32 {dimension_numbers = #tpu.dot_dimension_numbers<[1], [0], [0], [1], [0, 0, 1, 1], [], []>} : vector<16x32xbf16>, vector<32x96xbf16>, vector<16x96xf32> -> vector<16x96xf32>
    %43 = vector.broadcast %10 : vector<1x96xf32> to vector<16x96xf32>
    %44 = arith.addf %42, %43 : vector<16x96xf32>
    %45 = vector.extract_strided_slice %44 {offsets = [0, 0], sizes = [16, 32], strides = [1, 1]} : vector<16x96xf32> to vector<16x32xf32>
    %cst_33 = arith.constant 0.176776692 : f32
    %46 = vector.broadcast %cst_33 : f32 to vector<16x32xf32>
    %47 = arith.mulf %45, %46 : vector<16x32xf32>
    %48 = vector.shape_cast %47 : vector<16x32xf32> to vector<2x8x32xf32>
    %49 = vector.extract_strided_slice %44 {offsets = [0, 32], sizes = [16, 32], strides = [1, 1]} : vector<16x96xf32> to vector<16x32xf32>
    %50 = vector.shape_cast %49 : vector<16x32xf32> to vector<2x8x32xf32>
    %51 = vector.extract_strided_slice %44 {offsets = [0, 64], sizes = [16, 32], strides = [1, 1]} : vector<16x96xf32> to vector<16x32xf32>
    %52 = vector.shape_cast %51 : vector<16x32xf32> to vector<2x8x32xf32>
    %53 = arith.truncf %48 : vector<2x8x32xf32> to vector<2x8x32xbf16>
    %54 = arith.truncf %50 : vector<2x8x32xf32> to vector<2x8x32xbf16>
    "tpu.trace_start"() <{level = 10 : i32, message = "bqd,bkd->bqk"}> : () -> ()
    %cst_34 = arith.constant dense<0.000000e+00> : vector<2x8x8xf32>
    %55 = tpu.matmul %53, %54, %cst_34 {dimension_numbers = #tpu.dot_dimension_numbers<[2], [2], [1], [1], [0, 0, 0, 1, 1, 1], [0], [0]>} : vector<2x8x32xbf16>, vector<2x8x32xbf16>, vector<2x8x8xf32> -> vector<2x8x8xf32>
    "tpu.trace_stop"() : () -> ()
    %cst_35 = arith.constant dense<0xFF800000> : vector<2x8xf32>
    %56 = vector.multi_reduction <maximumf>, %55, %cst_35 [2] : vector<2x8x8xf32> to vector<2x8xf32>
    %57 = vector.shape_cast %56 : vector<2x8xf32> to vector<2x8x1xf32>
    %58 = vector.broadcast %57 : vector<2x8x1xf32> to vector<2x8x8xf32>
    %59 = arith.subf %55, %58 : vector<2x8x8xf32>
    %60 = math.exp %59 : vector<2x8x8xf32>
    %cst_36 = arith.constant dense<0.000000e+00> : vector<2x8xf32>
    %61 = vector.multi_reduction <add>, %60, %cst_36 [2] : vector<2x8x8xf32> to vector<2x8xf32>
    %62 = vector.shape_cast %61 : vector<2x8xf32> to vector<2x8x1xf32>
    %63 = tpu.reciprocal %62 {approx = true} : vector<2x8x1xf32> -> vector<2x8x1xf32>
    %64 = vector.broadcast %63 : vector<2x8x1xf32> to vector<2x8x8xf32>
    %65 = arith.mulf %60, %64 : vector<2x8x8xf32>
    %66 = arith.truncf %65 : vector<2x8x8xf32> to vector<2x8x8xbf16>
    %67 = arith.truncf %52 : vector<2x8x32xf32> to vector<2x8x32xbf16>
    "tpu.trace_start"() <{level = 10 : i32, message = "bqk,bkd->bqd"}> : () -> ()
    %cst_37 = arith.constant dense<0.000000e+00> : vector<2x8x32xf32>
    %68 = tpu.matmul %66, %67, %cst_37 {dimension_numbers = #tpu.dot_dimension_numbers<[2], [1], [1], [2], [0, 0, 0, 1, 1, 2], [0], [0]>} : vector<2x8x8xbf16>, vector<2x8x32xbf16>, vector<2x8x32xf32> -> vector<2x8x32xf32>
    "tpu.trace_stop"() : () -> ()
    %69 = vector.shape_cast %68 : vector<2x8x32xf32> to vector<16x32xf32>
    %70 = arith.truncf %69 : vector<16x32xf32> to vector<16x32xbf16>
    %cst_38 = arith.constant dense<0.000000e+00> : vector<16x32xf32>
    %71 = tpu.matmul %70, %11, %cst_38 {dimension_numbers = #tpu.dot_dimension_numbers<[1], [0], [0], [1], [0, 0, 1, 1], [], []>} : vector<16x32xbf16>, vector<32x32xbf16>, vector<16x32xf32> -> vector<16x32xf32>
    %72 = vector.broadcast %12 : vector<1x32xf32> to vector<16x32xf32>
    %73 = arith.addf %71, %72 : vector<16x32xf32>
    %74 = arith.addf %6, %73 : vector<16x32xf32>
    %cst_39 = arith.constant dense<0.000000e+00> : vector<16xf32>
    %75 = vector.multi_reduction <add>, %74, %cst_39 [1] : vector<16x32xf32> to vector<16xf32>
    %76 = vector.shape_cast %75 : vector<16xf32> to vector<16x1xf32>
    %cst_40 = arith.constant 3.200000e+01 : f32
    %77 = vector.broadcast %cst_40 : f32 to vector<16x1xf32>
    %78 = arith.divf %76, %77 : vector<16x1xf32>
    %79 = vector.broadcast %78 : vector<16x1xf32> to vector<16x32xf32>
    %80 = arith.subf %74, %79 : vector<16x32xf32>
    %81 = arith.mulf %80, %80 : vector<16x32xf32>
    %cst_41 = arith.constant dense<0.000000e+00> : vector<16xf32>
    %82 = vector.multi_reduction <add>, %81, %cst_41 [1] : vector<16x32xf32> to vector<16xf32>
    %83 = vector.shape_cast %82 : vector<16xf32> to vector<16x1xf32>
    %cst_42 = arith.constant 3.200000e+01 : f32
    %84 = vector.broadcast %cst_42 : f32 to vector<16x1xf32>
    %85 = arith.divf %83, %84 : vector<16x1xf32>
    %86 = vector.broadcast %78 : vector<16x1xf32> to vector<16x32xf32>
    %87 = arith.subf %74, %86 : vector<16x32xf32>
    %cst_43 = arith.constant 9.99999974E-6 : f32
    %88 = vector.broadcast %cst_43 : f32 to vector<16x1xf32>
    %89 = arith.addf %85, %88 : vector<16x1xf32>
    %90 = math.rsqrt %89 : vector<16x1xf32>
    %91 = vector.broadcast %90 : vector<16x1xf32> to vector<16x32xf32>
    %92 = arith.mulf %87, %91 : vector<16x32xf32>
    %93 = vector.broadcast %13 : vector<1x32xf32> to vector<16x32xf32>
    %94 = arith.mulf %92, %93 : vector<16x32xf32>
    %95 = vector.broadcast %14 : vector<1x32xf32> to vector<16x32xf32>
    %96 = arith.addf %94, %95 : vector<16x32xf32>
    %97 = arith.truncf %96 : vector<16x32xf32> to vector<16x32xbf16>
    %cst_44 = arith.constant dense<0.000000e+00> : vector<16x64xf32>
    %98 = tpu.matmul %97, %15, %cst_44 {dimension_numbers = #tpu.dot_dimension_numbers<[1], [0], [0], [1], [0, 0, 1, 1], [], []>} : vector<16x32xbf16>, vector<32x64xbf16>, vector<16x64xf32> -> vector<16x64xf32>
    %99 = vector.broadcast %16 : vector<1x64xf32> to vector<16x64xf32>
    %100 = arith.addf %98, %99 : vector<16x64xf32>
    %101 = arith.mulf %100, %100 : vector<16x64xf32>
    %102 = arith.mulf %100, %101 : vector<16x64xf32>
    %cst_45 = arith.constant 4.471500e-02 : f32
    %103 = vector.broadcast %cst_45 : f32 to vector<16x64xf32>
    %104 = arith.mulf %103, %102 : vector<16x64xf32>
    %105 = arith.addf %100, %104 : vector<16x64xf32>
    %cst_46 = arith.constant 0.797884583 : f32
    %106 = vector.broadcast %cst_46 : f32 to vector<16x64xf32>
    %107 = arith.mulf %106, %105 : vector<16x64xf32>
    %108 = math.tanh %107 : vector<16x64xf32>
    %cst_47 = arith.constant 1.000000e+00 : f32
    %109 = vector.broadcast %cst_47 : f32 to vector<16x64xf32>
    %110 = arith.addf %109, %108 : vector<16x64xf32>
    %cst_48 = arith.constant 5.000000e-01 : f32
    %111 = vector.broadcast %cst_48 : f32 to vector<16x64xf32>
    %112 = arith.mulf %111, %110 : vector<16x64xf32>
    %113 = arith.mulf %100, %112 : vector<16x64xf32>
    %114 = arith.truncf %113 : vector<16x64xf32> to vector<16x64xbf16>
    %cst_49 = arith.constant dense<0.000000e+00> : vector<16x32xf32>
    %115 = tpu.matmul %114, %17, %cst_49 {dimension_numbers = #tpu.dot_dimension_numbers<[1], [0], [0], [1], [0, 0, 1, 1], [], []>} : vector<16x64xbf16>, vector<64x32xbf16>, vector<16x32xf32> -> vector<16x32xf32>
    %116 = vector.broadcast %18 : vector<1x32xf32> to vector<16x32xf32>
    %117 = arith.addf %115, %116 : vector<16x32xf32>
    %118 = arith.addf %74, %117 : vector<16x32xf32>
    %119 = vector.shape_cast %118 : vector<16x32xf32> to vector<2x8x32xf32>
    %120 = vector.extract_strided_slice %119 {offsets = [0, 0, 0], sizes = [2, 1, 32], strides = [1, 1, 1]} : vector<2x8x32xf32> to vector<2x1x32xf32>
    %121 = vector.shape_cast %120 : vector<2x1x32xf32> to vector<2x32xf32>
    %c0_50 = arith.constant 0 : index
    %c0_51 = arith.constant 0 : index
    %122 = vector.load %arg14[%c0_50, %c0_51] : memref<32x32xbf16, #tpu.memory_space<vmem>>, vector<32x32xbf16>
    %123 = arith.truncf %121 : vector<2x32xf32> to vector<2x32xbf16>
    %cst_52 = arith.constant dense<0.000000e+00> : vector<2x32xf32>
    %124 = tpu.matmul %123, %122, %cst_52 {dimension_numbers = #tpu.dot_dimension_numbers<[1], [0], [0], [1], [0, 0, 1, 1], [], []>} : vector<2x32xbf16>, vector<32x32xbf16>, vector<2x32xf32> -> vector<2x32xf32>
    %c0_53 = arith.constant 0 : index
    %c0_54 = arith.constant 0 : index
    %125 = vector.load %arg15[%c0_53, %c0_54] : memref<1x32xf32, #tpu.memory_space<vmem>>, vector<1x32xf32>
    %126 = vector.broadcast %125 : vector<1x32xf32> to vector<2x32xf32>
    %127 = arith.addf %124, %126 : vector<2x32xf32>
    %128 = math.tanh %127 : vector<2x32xf32>
    %c0_55 = arith.constant 0 : index
    %c0_56 = arith.constant 0 : index
    %129 = vector.load %arg16[%c0_55, %c0_56] : memref<32x48xf32, #tpu.memory_space<vmem>>, vector<32x48xf32>
    %c0_57 = arith.constant 0 : index
    %c0_58 = arith.constant 0 : index
    %130 = vector.load %arg17[%c0_57, %c0_58] : memref<48x32xbf16, #tpu.memory_space<vmem>>, vector<48x32xbf16>
    %131 = arith.truncf %129 : vector<32x48xf32> to vector<32x48xbf16>
    %cst_59 = arith.constant dense<0.000000e+00> : vector<32x32xf32>
    %132 = tpu.matmul %131, %130, %cst_59 {dimension_numbers = #tpu.dot_dimension_numbers<[1], [0], [0], [1], [0, 0, 1, 1], [], []>} : vector<32x48xbf16>, vector<48x32xbf16>, vector<32x32xf32> -> vector<32x32xf32>
    %c0_60 = arith.constant 0 : index
    %c0_61 = arith.constant 0 : index
    %133 = vector.load %arg18[%c0_60, %c0_61] : memref<1x32xf32, #tpu.memory_space<vmem>>, vector<1x32xf32>
    %134 = vector.broadcast %133 : vector<1x32xf32> to vector<32x32xf32>
    %135 = arith.addf %132, %134 : vector<32x32xf32>
    %136 = vector.shape_cast %135 : vector<32x32xf32> to vector<2x16x32xf32>
    %c0_62 = arith.constant 0 : index
    %c0_63 = arith.constant 0 : index
    %137 = vector.load %arg19[%c0_62, %c0_63] : memref<16x32xf32, #tpu.memory_space<vmem>>, vector<16x32xf32>
    %138 = vector.shape_cast %137 : vector<16x32xf32> to vector<1x16x32xf32>
    %139 = vector.broadcast %138 : vector<1x16x32xf32> to vector<2x16x32xf32>
    %140 = arith.addf %136, %139 : vector<2x16x32xf32>
    %141 = vector.shape_cast %140 : vector<2x16x32xf32> to vector<32x32xf32>
    %c0_64 = arith.constant 0 : index
    %c0_65 = arith.constant 0 : index
    %142 = vector.load %arg20[%c0_64, %c0_65] : memref<1x32xf32, #tpu.memory_space<vmem>>, vector<1x32xf32>
    %c0_66 = arith.constant 0 : index
    %c0_67 = arith.constant 0 : index
    %143 = vector.load %arg21[%c0_66, %c0_67] : memref<1x32xf32, #tpu.memory_space<vmem>>, vector<1x32xf32>
    %c0_68 = arith.constant 0 : index
    %c0_69 = arith.constant 0 : index
    %144 = vector.load %arg22[%c0_68, %c0_69] : memref<32x96xbf16, #tpu.memory_space<vmem>>, vector<32x96xbf16>
    %c0_70 = arith.constant 0 : index
    %c0_71 = arith.constant 0 : index
    %145 = vector.load %arg23[%c0_70, %c0_71] : memref<1x96xf32, #tpu.memory_space<vmem>>, vector<1x96xf32>
    %c0_72 = arith.constant 0 : index
    %c0_73 = arith.constant 0 : index
    %146 = vector.load %arg24[%c0_72, %c0_73] : memref<32x32xbf16, #tpu.memory_space<vmem>>, vector<32x32xbf16>
    %c0_74 = arith.constant 0 : index
    %c0_75 = arith.constant 0 : index
    %147 = vector.load %arg25[%c0_74, %c0_75] : memref<1x32xf32, #tpu.memory_space<vmem>>, vector<1x32xf32>
    %c0_76 = arith.constant 0 : index
    %c0_77 = arith.constant 0 : index
    %148 = vector.load %arg26[%c0_76, %c0_77] : memref<1x32xf32, #tpu.memory_space<vmem>>, vector<1x32xf32>
    %c0_78 = arith.constant 0 : index
    %c0_79 = arith.constant 0 : index
    %149 = vector.load %arg27[%c0_78, %c0_79] : memref<1x32xf32, #tpu.memory_space<vmem>>, vector<1x32xf32>
    %c0_80 = arith.constant 0 : index
    %c0_81 = arith.constant 0 : index
    %150 = vector.load %arg28[%c0_80, %c0_81] : memref<32x64xbf16, #tpu.memory_space<vmem>>, vector<32x64xbf16>
    %c0_82 = arith.constant 0 : index
    %c0_83 = arith.constant 0 : index
    %151 = vector.load %arg29[%c0_82, %c0_83] : memref<1x64xf32, #tpu.memory_space<vmem>>, vector<1x64xf32>
    %c0_84 = arith.constant 0 : index
    %c0_85 = arith.constant 0 : index
    %152 = vector.load %arg30[%c0_84, %c0_85] : memref<64x32xbf16, #tpu.memory_space<vmem>>, vector<64x32xbf16>
    %c0_86 = arith.constant 0 : index
    %c0_87 = arith.constant 0 : index
    %153 = vector.load %arg31[%c0_86, %c0_87] : memref<1x32xf32, #tpu.memory_space<vmem>>, vector<1x32xf32>
    %cst_88 = arith.constant dense<0.000000e+00> : vector<32xf32>
    %154 = vector.multi_reduction <add>, %141, %cst_88 [1] : vector<32x32xf32> to vector<32xf32>
    %155 = vector.shape_cast %154 : vector<32xf32> to vector<32x1xf32>
    %cst_89 = arith.constant 3.200000e+01 : f32
    %156 = vector.broadcast %cst_89 : f32 to vector<32x1xf32>
    %157 = arith.divf %155, %156 : vector<32x1xf32>
    %158 = vector.broadcast %157 : vector<32x1xf32> to vector<32x32xf32>
    %159 = arith.subf %141, %158 : vector<32x32xf32>
    %160 = arith.mulf %159, %159 : vector<32x32xf32>
    %cst_90 = arith.constant dense<0.000000e+00> : vector<32xf32>
    %161 = vector.multi_reduction <add>, %160, %cst_90 [1] : vector<32x32xf32> to vector<32xf32>
    %162 = vector.shape_cast %161 : vector<32xf32> to vector<32x1xf32>
    %cst_91 = arith.constant 3.200000e+01 : f32
    %163 = vector.broadcast %cst_91 : f32 to vector<32x1xf32>
    %164 = arith.divf %162, %163 : vector<32x1xf32>
    %165 = vector.broadcast %157 : vector<32x1xf32> to vector<32x32xf32>
    %166 = arith.subf %141, %165 : vector<32x32xf32>
    %cst_92 = arith.constant 9.99999974E-6 : f32
    %167 = vector.broadcast %cst_92 : f32 to vector<32x1xf32>
    %168 = arith.addf %164, %167 : vector<32x1xf32>
    %169 = math.rsqrt %168 : vector<32x1xf32>
    %170 = vector.broadcast %169 : vector<32x1xf32> to vector<32x32xf32>
    %171 = arith.mulf %166, %170 : vector<32x32xf32>
    %172 = vector.broadcast %142 : vector<1x32xf32> to vector<32x32xf32>
    %173 = arith.mulf %171, %172 : vector<32x32xf32>
    %174 = vector.broadcast %143 : vector<1x32xf32> to vector<32x32xf32>
    %175 = arith.addf %173, %174 : vector<32x32xf32>
    %176 = arith.truncf %175 : vector<32x32xf32> to vector<32x32xbf16>
    %cst_93 = arith.constant dense<0.000000e+00> : vector<32x96xf32>
    %177 = tpu.matmul %176, %144, %cst_93 {dimension_numbers = #tpu.dot_dimension_numbers<[1], [0], [0], [1], [0, 0, 1, 1], [], []>} : vector<32x32xbf16>, vector<32x96xbf16>, vector<32x96xf32> -> vector<32x96xf32>
    %178 = vector.broadcast %145 : vector<1x96xf32> to vector<32x96xf32>
    %179 = arith.addf %177, %178 : vector<32x96xf32>
    %180 = vector.extract_strided_slice %179 {offsets = [0, 0], sizes = [32, 32], strides = [1, 1]} : vector<32x96xf32> to vector<32x32xf32>
    %cst_94 = arith.constant 0.176776692 : f32
    %181 = vector.broadcast %cst_94 : f32 to vector<32x32xf32>
    %182 = arith.mulf %180, %181 : vector<32x32xf32>
    %183 = vector.shape_cast %182 : vector<32x32xf32> to vector<2x16x32xf32>
    %184 = vector.extract_strided_slice %179 {offsets = [0, 32], sizes = [32, 32], strides = [1, 1]} : vector<32x96xf32> to vector<32x32xf32>
    %185 = vector.shape_cast %184 : vector<32x32xf32> to vector<2x16x32xf32>
    %186 = vector.extract_strided_slice %179 {offsets = [0, 64], sizes = [32, 32], strides = [1, 1]} : vector<32x96xf32> to vector<32x32xf32>
    %187 = vector.shape_cast %186 : vector<32x32xf32> to vector<2x16x32xf32>
    %188 = arith.truncf %183 : vector<2x16x32xf32> to vector<2x16x32xbf16>
    %189 = arith.truncf %185 : vector<2x16x32xf32> to vector<2x16x32xbf16>
    "tpu.trace_start"() <{level = 10 : i32, message = "bqd,bkd->bqk"}> : () -> ()
    %cst_95 = arith.constant dense<0.000000e+00> : vector<2x16x16xf32>
    %190 = tpu.matmul %188, %189, %cst_95 {dimension_numbers = #tpu.dot_dimension_numbers<[2], [2], [1], [1], [0, 0, 0, 1, 1, 1], [0], [0]>} : vector<2x16x32xbf16>, vector<2x16x32xbf16>, vector<2x16x16xf32> -> vector<2x16x16xf32>
    "tpu.trace_stop"() : () -> ()
    %cst_96 = arith.constant dense<0xFF800000> : vector<2x16xf32>
    %191 = vector.multi_reduction <maximumf>, %190, %cst_96 [2] : vector<2x16x16xf32> to vector<2x16xf32>
    %192 = vector.shape_cast %191 : vector<2x16xf32> to vector<2x16x1xf32>
    %193 = vector.broadcast %192 : vector<2x16x1xf32> to vector<2x16x16xf32>
    %194 = arith.subf %190, %193 : vector<2x16x16xf32>
    %195 = math.exp %194 : vector<2x16x16xf32>
    %cst_97 = arith.constant dense<0.000000e+00> : vector<2x16xf32>
    %196 = vector.multi_reduction <add>, %195, %cst_97 [2] : vector<2x16x16xf32> to vector<2x16xf32>
    %197 = vector.shape_cast %196 : vector<2x16xf32> to vector<2x16x1xf32>
    %198 = tpu.reciprocal %197 {approx = true} : vector<2x16x1xf32> -> vector<2x16x1xf32>
    %199 = vector.broadcast %198 : vector<2x16x1xf32> to vector<2x16x16xf32>
    %200 = arith.mulf %195, %199 : vector<2x16x16xf32>
    %201 = arith.truncf %200 : vector<2x16x16xf32> to vector<2x16x16xbf16>
    %202 = arith.truncf %187 : vector<2x16x32xf32> to vector<2x16x32xbf16>
    "tpu.trace_start"() <{level = 10 : i32, message = "bqk,bkd->bqd"}> : () -> ()
    %cst_98 = arith.constant dense<0.000000e+00> : vector<2x16x32xf32>
    %203 = tpu.matmul %201, %202, %cst_98 {dimension_numbers = #tpu.dot_dimension_numbers<[2], [1], [1], [2], [0, 0, 0, 1, 1, 2], [0], [0]>} : vector<2x16x16xbf16>, vector<2x16x32xbf16>, vector<2x16x32xf32> -> vector<2x16x32xf32>
    "tpu.trace_stop"() : () -> ()
    %204 = vector.shape_cast %203 : vector<2x16x32xf32> to vector<32x32xf32>
    %205 = arith.truncf %204 : vector<32x32xf32> to vector<32x32xbf16>
    %cst_99 = arith.constant dense<0.000000e+00> : vector<32x32xf32>
    %206 = tpu.matmul %205, %146, %cst_99 {dimension_numbers = #tpu.dot_dimension_numbers<[1], [0], [0], [1], [0, 0, 1, 1], [], []>} : vector<32x32xbf16>, vector<32x32xbf16>, vector<32x32xf32> -> vector<32x32xf32>
    %207 = vector.broadcast %147 : vector<1x32xf32> to vector<32x32xf32>
    %208 = arith.addf %206, %207 : vector<32x32xf32>
    %209 = arith.addf %141, %208 : vector<32x32xf32>
    %cst_100 = arith.constant dense<0.000000e+00> : vector<32xf32>
    %210 = vector.multi_reduction <add>, %209, %cst_100 [1] : vector<32x32xf32> to vector<32xf32>
    %211 = vector.shape_cast %210 : vector<32xf32> to vector<32x1xf32>
    %cst_101 = arith.constant 3.200000e+01 : f32
    %212 = vector.broadcast %cst_101 : f32 to vector<32x1xf32>
    %213 = arith.divf %211, %212 : vector<32x1xf32>
    %214 = vector.broadcast %213 : vector<32x1xf32> to vector<32x32xf32>
    %215 = arith.subf %209, %214 : vector<32x32xf32>
    %216 = arith.mulf %215, %215 : vector<32x32xf32>
    %cst_102 = arith.constant dense<0.000000e+00> : vector<32xf32>
    %217 = vector.multi_reduction <add>, %216, %cst_102 [1] : vector<32x32xf32> to vector<32xf32>
    %218 = vector.shape_cast %217 : vector<32xf32> to vector<32x1xf32>
    %cst_103 = arith.constant 3.200000e+01 : f32
    %219 = vector.broadcast %cst_103 : f32 to vector<32x1xf32>
    %220 = arith.divf %218, %219 : vector<32x1xf32>
    %221 = vector.broadcast %213 : vector<32x1xf32> to vector<32x32xf32>
    %222 = arith.subf %209, %221 : vector<32x32xf32>
    %cst_104 = arith.constant 9.99999974E-6 : f32
    %223 = vector.broadcast %cst_104 : f32 to vector<32x1xf32>
    %224 = arith.addf %220, %223 : vector<32x1xf32>
    %225 = math.rsqrt %224 : vector<32x1xf32>
    %226 = vector.broadcast %225 : vector<32x1xf32> to vector<32x32xf32>
    %227 = arith.mulf %222, %226 : vector<32x32xf32>
    %228 = vector.broadcast %148 : vector<1x32xf32> to vector<32x32xf32>
    %229 = arith.mulf %227, %228 : vector<32x32xf32>
    %230 = vector.broadcast %149 : vector<1x32xf32> to vector<32x32xf32>
    %231 = arith.addf %229, %230 : vector<32x32xf32>
    %232 = arith.truncf %231 : vector<32x32xf32> to vector<32x32xbf16>
    %cst_105 = arith.constant dense<0.000000e+00> : vector<32x64xf32>
    %233 = tpu.matmul %232, %150, %cst_105 {dimension_numbers = #tpu.dot_dimension_numbers<[1], [0], [0], [1], [0, 0, 1, 1], [], []>} : vector<32x32xbf16>, vector<32x64xbf16>, vector<32x64xf32> -> vector<32x64xf32>
    %234 = vector.broadcast %151 : vector<1x64xf32> to vector<32x64xf32>
    %235 = arith.addf %233, %234 : vector<32x64xf32>
    %236 = arith.mulf %235, %235 : vector<32x64xf32>
    %237 = arith.mulf %235, %236 : vector<32x64xf32>
    %cst_106 = arith.constant 4.471500e-02 : f32
    %238 = vector.broadcast %cst_106 : f32 to vector<32x64xf32>
    %239 = arith.mulf %238, %237 : vector<32x64xf32>
    %240 = arith.addf %235, %239 : vector<32x64xf32>
    %cst_107 = arith.constant 0.797884583 : f32
    %241 = vector.broadcast %cst_107 : f32 to vector<32x64xf32>
    %242 = arith.mulf %241, %240 : vector<32x64xf32>
    %243 = math.tanh %242 : vector<32x64xf32>
    %cst_108 = arith.constant 1.000000e+00 : f32
    %244 = vector.broadcast %cst_108 : f32 to vector<32x64xf32>
    %245 = arith.addf %244, %243 : vector<32x64xf32>
    %cst_109 = arith.constant 5.000000e-01 : f32
    %246 = vector.broadcast %cst_109 : f32 to vector<32x64xf32>
    %247 = arith.mulf %246, %245 : vector<32x64xf32>
    %248 = arith.mulf %235, %247 : vector<32x64xf32>
    %249 = arith.truncf %248 : vector<32x64xf32> to vector<32x64xbf16>
    %cst_110 = arith.constant dense<0.000000e+00> : vector<32x32xf32>
    %250 = tpu.matmul %249, %152, %cst_110 {dimension_numbers = #tpu.dot_dimension_numbers<[1], [0], [0], [1], [0, 0, 1, 1], [], []>} : vector<32x64xbf16>, vector<64x32xbf16>, vector<32x32xf32> -> vector<32x32xf32>
    %251 = vector.broadcast %153 : vector<1x32xf32> to vector<32x32xf32>
    %252 = arith.addf %250, %251 : vector<32x32xf32>
    %253 = arith.addf %209, %252 : vector<32x32xf32>
    %c0_111 = arith.constant 0 : index
    %c0_112 = arith.constant 0 : index
    %254 = vector.load %arg32[%c0_111, %c0_112] : memref<1x32xf32, #tpu.memory_space<vmem>>, vector<1x32xf32>
    %c0_113 = arith.constant 0 : index
    %c0_114 = arith.constant 0 : index
    %255 = vector.load %arg33[%c0_113, %c0_114] : memref<1x32xf32, #tpu.memory_space<vmem>>, vector<1x32xf32>
    %cst_115 = arith.constant dense<0.000000e+00> : vector<32xf32>
    %256 = vector.multi_reduction <add>, %253, %cst_115 [1] : vector<32x32xf32> to vector<32xf32>
    %257 = vector.shape_cast %256 : vector<32xf32> to vector<32x1xf32>
    %cst_116 = arith.constant 3.200000e+01 : f32
    %258 = vector.broadcast %cst_116 : f32 to vector<32x1xf32>
    %259 = arith.divf %257, %258 : vector<32x1xf32>
    %260 = vector.broadcast %259 : vector<32x1xf32> to vector<32x32xf32>
    %261 = arith.subf %253, %260 : vector<32x32xf32>
    %262 = arith.mulf %261, %261 : vector<32x32xf32>
    %cst_117 = arith.constant dense<0.000000e+00> : vector<32xf32>
    %263 = vector.multi_reduction <add>, %262, %cst_117 [1] : vector<32x32xf32> to vector<32xf32>
    %264 = vector.shape_cast %263 : vector<32xf32> to vector<32x1xf32>
    %cst_118 = arith.constant 3.200000e+01 : f32
    %265 = vector.broadcast %cst_118 : f32 to vector<32x1xf32>
    %266 = arith.divf %264, %265 : vector<32x1xf32>
    %267 = vector.broadcast %259 : vector<32x1xf32> to vector<32x32xf32>
    %268 = arith.subf %253, %267 : vector<32x32xf32>
    %cst_119 = arith.constant 9.99999974E-6 : f32
    %269 = vector.broadcast %cst_119 : f32 to vector<32x1xf32>
    %270 = arith.addf %266, %269 : vector<32x1xf32>
    %271 = math.rsqrt %270 : vector<32x1xf32>
    %272 = vector.broadcast %271 : vector<32x1xf32> to vector<32x32xf32>
    %273 = arith.mulf %268, %272 : vector<32x32xf32>
    %274 = vector.broadcast %254 : vector<1x32xf32> to vector<32x32xf32>
    %275 = arith.mulf %273, %274 : vector<32x32xf32>
    %276 = vector.broadcast %255 : vector<1x32xf32> to vector<32x32xf32>
    %277 = arith.addf %275, %276 : vector<32x32xf32>
    %278 = vector.shape_cast %277 : vector<32x32xf32> to vector<2x16x32xf32>
    %cst_120 = arith.constant dense<0.000000e+00> : vector<2x32xf32>
    %279 = vector.multi_reduction <add>, %278, %cst_120 [1] : vector<2x16x32xf32> to vector<2x32xf32>
    %cst_121 = arith.constant 1.600000e+01 : f32
    %280 = vector.broadcast %cst_121 : f32 to vector<2x32xf32>
    %281 = arith.divf %279, %280 : vector<2x32xf32>
    %c0_122 = arith.constant 0 : index
    %c0_123 = arith.constant 0 : index
    %282 = vector.load %arg34[%c0_122, %c0_123] : memref<32x10xbf16, #tpu.memory_space<vmem>>, vector<32x10xbf16>
    %283 = arith.truncf %281 : vector<2x32xf32> to vector<2x32xbf16>
    %cst_124 = arith.constant dense<0.000000e+00> : vector<2x10xf32>
    %284 = tpu.matmul %283, %282, %cst_124 {dimension_numbers = #tpu.dot_dimension_numbers<[1], [0], [0], [1], [0, 0, 1, 1], [], []>} : vector<2x32xbf16>, vector<32x10xbf16>, vector<2x10xf32> -> vector<2x10xf32>
    %c0_125 = arith.constant 0 : index
    %c0_126 = arith.constant 0 : index
    %285 = vector.load %arg35[%c0_125, %c0_126] : memref<32x10xbf16, #tpu.memory_space<vmem>>, vector<32x10xbf16>
    %286 = arith.truncf %128 : vector<2x32xf32> to vector<2x32xbf16>
    %cst_127 = arith.constant dense<0.000000e+00> : vector<2x10xf32>
    %287 = tpu.matmul %286, %285, %cst_127 {dimension_numbers = #tpu.dot_dimension_numbers<[1], [0], [0], [1], [0, 0, 1, 1], [], []>} : vector<2x32xbf16>, vector<32x10xbf16>, vector<2x10xf32> -> vector<2x10xf32>
    %288 = arith.addf %284, %287 : vector<2x10xf32>
    %c0_128 = arith.constant 0 : index
    %c0_129 = arith.constant 0 : index
    %289 = vector.load %arg36[%c0_128, %c0_129] : memref<1x10xf32, #tpu.memory_space<vmem>>, vector<1x10xf32>
    %290 = vector.broadcast %289 : vector<1x10xf32> to vector<2x10xf32>
    %291 = arith.addf %288, %290 : vector<2x10xf32>
    %c0_130 = arith.constant 0 : index
    %c0_131 = arith.constant 0 : index
    %292 = vector.load %arg37[%c0_130, %c0_131] : memref<2x10xf32, #tpu.memory_space<vmem>>, vector<2x10xf32>
    tpu.vector_store %arg37[%c0_130, %c0_131], %291 {strides = array<i32>} : memref<2x10xf32, #tpu.memory_space<vmem>>, vector<2x10xf32>,
    return
  }
}

</mosaic_0001>

<llo_original>
// kernel: vqa_forward.1
$region0: #{vqa_forward.1}
  #allocation0 [shape = 'u32[]', space=smem, size = 0x4, offset = 0x4, fixed_abs, tag = 'smem constant byte address 0x4 - core index']
  #allocation1 [shape = 'u32[144,128]{1,0:T(1,128)}', space=vmem, size = 0x12000, scoped, tag = 'internal scratch']
  %s0 = inlined_call_operand.smem [shape: u32[38], index: -1, kind: input, shape index: {}]
  %s1 = sld [smem:[%s0]]
  %s2 = scalar_lea.smem %s0, 1
  %s3 = sld [smem:[%s2]]
  %s4 = scalar_lea.smem %s0, 2
  %s5 = sld [smem:[%s4]]
  %s6 = scalar_lea.smem %s0, 3
  %s7 = sld [smem:[%s6]]
  %s8 = scalar_lea.smem %s0, 4
  %s9 = sld [smem:[%s8]]
  %s10 = scalar_lea.smem %s0, 5
  %s11 = sld [smem:[%s10]]
  %s12 = scalar_lea.smem %s0, 6
  %s13 = sld [smem:[%s12]]
  %s14 = scalar_lea.smem %s0, 7
  %s15 = sld [smem:[%s14]]
  %s16 = scalar_lea.smem %s0, 8
  %s17 = sld [smem:[%s16]]
  %s18 = scalar_lea.smem %s0, 9
  %s19 = sld [smem:[%s18]]
  %s20 = scalar_lea.smem %s0, 10
  %s21 = sld [smem:[%s20]]
  %s22 = scalar_lea.smem %s0, 11
  %s23 = sld [smem:[%s22]]
  %s24 = scalar_lea.smem %s0, 12
  %s25 = sld [smem:[%s24]]
  %s26 = scalar_lea.smem %s0, 13
  %s27 = sld [smem:[%s26]]
  %s28 = scalar_lea.smem %s0, 14
  %s29 = sld [smem:[%s28]]
  %s30 = scalar_lea.smem %s0, 15
  %s31 = sld [smem:[%s30]]
  %s32 = scalar_lea.smem %s0, 16
  %s33 = sld [smem:[%s32]]
  %s34 = scalar_lea.smem %s0, 17
  %s35 = sld [smem:[%s34]]
  %s36 = scalar_lea.smem %s0, 18
  %s37 = sld [smem:[%s36]]
  %s38 = scalar_lea.smem %s0, 19
  %s39 = sld [smem:[%s38]]
  %s40 = scalar_lea.smem %s0, 20
  %s41 = sld [smem:[%s40]]
  %s42 = scalar_lea.smem %s0, 21
  %s43 = sld [smem:[%s42]]
  %s44 = scalar_lea.smem %s0, 22
  %s45 = sld [smem:[%s44]]
  %s46 = scalar_lea.smem %s0, 23
  %s47 = sld [smem:[%s46]]
  %s48 = scalar_lea.smem %s0, 24
  %s49 = sld [smem:[%s48]]
  %s50 = scalar_lea.smem %s0, 25
  %s51 = sld [smem:[%s50]]
  %s52 = scalar_lea.smem %s0, 26
  %s53 = sld [smem:[%s52]]
  %s54 = scalar_lea.smem %s0, 27
  %s55 = sld [smem:[%s54]]
  %s56 = scalar_lea.smem %s0, 28
  %s57 = sld [smem:[%s56]]
  %s58 = scalar_lea.smem %s0, 29
  %s59 = sld [smem:[%s58]]
  %s60 = scalar_lea.smem %s0, 30
  %s61 = sld [smem:[%s60]]
  %s62 = scalar_lea.smem %s0, 31
  %s63 = sld [smem:[%s62]]
  %s64 = scalar_lea.smem %s0, 32
  %s65 = sld [smem:[%s64]]
  %s66 = scalar_lea.smem %s0, 33
  %s67 = sld [smem:[%s66]]
  %s68 = scalar_lea.smem %s0, 34
  %s69 = sld [smem:[%s68]]
  %s70 = scalar_lea.smem %s0, 35
  %s71 = sld [smem:[%s70]]
  %s72 = scalar_lea.smem %s0, 36
  %s73 = sld [smem:[%s72]]
  %s74 = scalar_lea.smem %s0, 37
  %s75 = sld [smem:[%s74]]
  %s76 = sld [smem:[#allocation0]]
  $region158: #{vqa_forward.1} parent=0
    _
  %s78 = ssub.s32 1, %s76
  %s79 = scalar_select 0, %s78, %s76
  $region1: #{vqa_forward.1} parent=0
    #allocation2 [shape = 'u8[1024]{0}', space=vmem, size = 0x400, scoped, tag = 'output window, operand 0, single buffered']
    #allocation3 [shape = 's32[1]{0}', space=sflag, size = 0x4, scoped, tag = 'scoped memory for vqa_forward.1']
    %80 = vsyncpa [#allocation3], 0
    // Predicated region
    $region2: #{vqa_forward.1} parent=1 // pred_check
      _
    $region3: #{vqa_forward.1} parent=1 // pred_check_branch
      %82 = sbr.rel (0) target = $region5
    $region4: #{vqa_forward.1} parent=1 // pred_region
      _
    $region5: #{vqa_forward.1} parent=1 // pred_fallthru
      _
    // Predicated region
    $region6: #{vqa_forward.1} parent=1 // pred_check
      _
    $region7: #{vqa_forward.1} parent=1 // pred_check_branch
      %84 = sbr.rel (0) target = $region9
    $region8: #{vqa_forward.1} parent=1 // pred_region
      _
    $region9: #{vqa_forward.1} parent=1 // pred_fallthru
      _
    // Predicated region
    $region10: #{vqa_forward.1} parent=1 // pred_check
      _
    $region11: #{vqa_forward.1} parent=1 // pred_check_branch
      %86 = sbr.rel (0) target = $region13
    $region12: #{vqa_forward.1} parent=1 // pred_region
      _
    $region13: #{vqa_forward.1} parent=1 // pred_fallthru
      _
    // Predicated region
    $region14: #{vqa_forward.1} parent=1 // pred_check
      _
    $region15: #{vqa_forward.1} parent=1 // pred_check_branch
      %88 = sbr.rel (0) target = $region17
    $region16: #{vqa_forward.1} parent=1 // pred_region
      _
    $region17: #{vqa_forward.1} parent=1 // pred_fallthru
      _
    // Predicated region
    $region18: #{vqa_forward.1} parent=1 // pred_check
      _
    $region19: #{vqa_forward.1} parent=1 // pred_check_branch
      %90 = sbr.rel (0) target = $region21
    $region20: #{vqa_forward.1} parent=1 // pred_region
      _
    $region21: #{vqa_forward.1} parent=1 // pred_fallthru
      _
    // Predicated region
    $region22: #{vqa_forward.1} parent=1 // pred_check
      _
    $region23: #{vqa_forward.1} parent=1 // pred_check_branch
      %92 = sbr.rel (0) target = $region25
    $region24: #{vqa_forward.1} parent=1 // pred_region
      _
    $region25: #{vqa_forward.1} parent=1 // pred_fallthru
      _
    // Predicated region
    $region26: #{vqa_forward.1} parent=1 // pred_check
      _
    $region27: #{vqa_forward.1} parent=1 // pred_check_branch
      %94 = sbr.rel (0) target = $region29
    $region28: #{vqa_forward.1} parent=1 // pred_region
      _
    $region29: #{vqa_forward.1} parent=1 // pred_fallthru
      _
    // Predicated region
    $region30: #{vqa_forward.1} parent=1 // pred_check
      _
    $region31: #{vqa_forward.1} parent=1 // pred_check_branch
      %96 = sbr.rel (0) target = $region33
    $region32: #{vqa_forward.1} parent=1 // pred_region
      _
    $region33: #{vqa_forward.1} parent=1 // pred_fallthru
      _
    // Predicated region
    $region34: #{vqa_forward.1} parent=1 // pred_check
      _
    $region35: #{vqa_forward.1} parent=1 // pred_check_branch
      %98 = sbr.rel (0) target = $region37
    $region36: #{vqa_forward.1} parent=1 // pred_region
      _
    $region37: #{vqa_forward.1} parent=1 // pred_fallthru
      _
    // Predicated region
    $region38: #{vqa_forward.1} parent=1 // pred_check
      _
    $region39: #{vqa_forward.1} parent=1 // pred_check_branch
      %100 = sbr.rel (0) target = $region41
    $region40: #{vqa_forward.1} parent=1 // pred_region
      _
    $region41: #{vqa_forward.1} parent=1 // pred_fallthru
      _
    // Predicated region
    $region42: #{vqa_forward.1} parent=1 // pred_check
      _
    $region43: #{vqa_forward.1} parent=1 // pred_check_branch
      %102 = sbr.rel (0) target = $region45
    $region44: #{vqa_forward.1} parent=1 // pred_region
      _
    $region45: #{vqa_forward.1} parent=1 // pred_fallthru
      _
    // Predicated region
    $region46: #{vqa_forward.1} parent=1 // pred_check
      _
    $region47: #{vqa_forward.1} parent=1 // pred_check_branch
      %104 = sbr.rel (0) target = $region49
    $region48: #{vqa_forward.1} parent=1 // pred_region
      _
    $region49: #{vqa_forward.1} parent=1 // pred_fallthru
      _
    // Predicated region
    $region50: #{vqa_forward.1} parent=1 // pred_check
      _
    $region51: #{vqa_forward.1} parent=1 // pred_check_branch
      %106 = sbr.rel (0) target = $region53
    $region52: #{vqa_forward.1} parent=1 // pred_region
      _
    $region53: #{vqa_forward.1} parent=1 // pred_fallthru
      _
    // Predicated region
    $region54: #{vqa_forward.1} parent=1 // pred_check
      _
    $region55: #{vqa_forward.1} parent=1 // pred_check_branch
      %108 = sbr.rel (0) target = $region57
    $region56: #{vqa_forward.1} parent=1 // pred_region
      _
    $region57: #{vqa_forward.1} parent=1 // pred_fallthru
      _
    // Predicated region
    $region58: #{vqa_forward.1} parent=1 // pred_check
      _
    $region59: #{vqa_forward.1} parent=1 // pred_check_branch
      %110 = sbr.rel (0) target = $region61
    $region60: #{vqa_forward.1} parent=1 // pred_region
      _
    $region61: #{vqa_forward.1} parent=1 // pred_fallthru
      _
    // Predicated region
    $region62: #{vqa_forward.1} parent=1 // pred_check
      _
    $region63: #{vqa_forward.1} parent=1 // pred_check_branch
      %112 = sbr.rel (0) target = $region65
    $region64: #{vqa_forward.1} parent=1 // pred_region
      _
    $region65: #{vqa_forward.1} parent=1 // pred_fallthru
      _
    // Predicated region
    $region66: #{vqa_forward.1} parent=1 // pred_check
      _
    $region67: #{vqa_forward.1} parent=1 // pred_check_branch
      %114 = sbr.rel (0) target = $region69
    $region68: #{vqa_forward.1} parent=1 // pred_region
      _
    $region69: #{vqa_forward.1} parent=1 // pred_fallthru
      _
    // Predicated region
    $region70: #{vqa_forward.1} parent=1 // pred_check
      _
    $region71: #{vqa_forward.1} parent=1 // pred_check_branch
      %116 = sbr.rel (0) target = $region73
    $region72: #{vqa_forward.1} parent=1 // pred_region
      _
    $region73: #{vqa_forward.1} parent=1 // pred_fallthru
      _
    // Predicated region
    $region74: #{vqa_forward.1} parent=1 // pred_check
      _
    $region75: #{vqa_forward.1} parent=1 // pred_check_branch
      %118 = sbr.rel (0) target = $region77
    $region76: #{vqa_forward.1} parent=1 // pred_region
      _
    $region77: #{vqa_forward.1} parent=1 // pred_fallthru
      _
    // Predicated region
    $region78: #{vqa_forward.1} parent=1 // pred_check
      _
    $region79: #{vqa_forward.1} parent=1 // pred_check_branch
      %120 = sbr.rel (0) target = $region81
    $region80: #{vqa_forward.1} parent=1 // pred_region
      _
    $region81: #{vqa_forward.1} parent=1 // pred_fallthru
      _
    // Predicated region
    $region82: #{vqa_forward.1} parent=1 // pred_check
      _
    $region83: #{vqa_forward.1} parent=1 // pred_check_branch
      %122 = sbr.rel (0) target = $region85
    $region84: #{vqa_forward.1} parent=1 // pred_region
      _
    $region85: #{vqa_forward.1} parent=1 // pred_fallthru
      _
    // Predicated region
    $region86: #{vqa_forward.1} parent=1 // pred_check
      _
    $region87: #{vqa_forward.1} parent=1 // pred_check_branch
      %124 = sbr.rel (0) target = $region89
    $region88: #{vqa_forward.1} parent=1 // pred_region
      _
    $region89: #{vqa_forward.1} parent=1 // pred_fallthru
      _
    // Predicated region
    $region90: #{vqa_forward.1} parent=1 // pred_check
      _
    $region91: #{vqa_forward.1} parent=1 // pred_check_branch
      %126 = sbr.rel (0) target = $region93
    $region92: #{vqa_forward.1} parent=1 // pred_region
      _
    $region93: #{vqa_forward.1} parent=1 // pred_fallthru
      _
    // Predicated region
    $region94: #{vqa_forward.1} parent=1 // pred_check
      _
    $region95: #{vqa_forward.1} parent=1 // pred_check_branch
      %128 = sbr.rel (0) target = $region97
    $region96: #{vqa_forward.1} parent=1 // pred_region
      _
    $region97: #{vqa_forward.1} parent=1 // pred_fallthru
      _
    // Predicated region
    $region98: #{vqa_forward.1} parent=1 // pred_check
      _
    $region99: #{vqa_forward.1} parent=1 // pred_check_branch
      %130 = sbr.rel (0) target = $region101
    $region100: #{vqa_forward.1} parent=1 // pred_region
      _
    $region101: #{vqa_forward.1} parent=1 // pred_fallthru
      _
    // Predicated region
    $region102: #{vqa_forward.1} parent=1 // pred_check
      _
    $region103: #{vqa_forward.1} parent=1 // pred_check_branch
      %132 = sbr.rel (0) target = $region105
    $region104: #{vqa_forward.1} parent=1 // pred_region
      _
    $region105: #{vqa_forward.1} parent=1 // pred_fallthru
      _
    // Predicated region
    $region106: #{vqa_forward.1} parent=1 // pred_check
      _
    $region107: #{vqa_forward.1} parent=1 // pred_check_branch
      %134 = sbr.rel (0) target = $region109
    $region108: #{vqa_forward.1} parent=1 // pred_region
      _
    $region109: #{vqa_forward.1} parent=1 // pred_fallthru
      _
    // Predicated region
    $region110: #{vqa_forward.1} parent=1 // pred_check
      _
    $region111: #{vqa_forward.1} parent=1 // pred_check_branch
      %136 = sbr.rel (0) target = $region113
    $region112: #{vqa_forward.1} parent=1 // pred_region
      _
    $region113: #{vqa_forward.1} parent=1 // pred_fallthru
      _
    // Predicated region
    $region114: #{vqa_forward.1} parent=1 // pred_check
      _
    $region115: #{vqa_forward.1} parent=1 // pred_check_branch
      %138 = sbr.rel (0) target = $region117
    $region116: #{vqa_forward.1} parent=1 // pred_region
      _
    $region117: #{vqa_forward.1} parent=1 // pred_fallthru
      _
    // Predicated region
    $region118: #{vqa_forward.1} parent=1 // pred_check
      _
    $region119: #{vqa_forward.1} parent=1 // pred_check_branch
      %140 = sbr.rel (0) target = $region121
    $region120: #{vqa_forward.1} parent=1 // pred_region
      _
    $region121: #{vqa_forward.1} parent=1 // pred_fallthru
      _
    // Predicated region
    $region122: #{vqa_forward.1} parent=1 // pred_check
      _
    $region123: #{vqa_forward.1} parent=1 // pred_check_branch
      %142 = sbr.rel (0) target = $region125
    $region124: #{vqa_forward.1} parent=1 // pred_region
      _
    $region125: #{vqa_forward.1} parent=1 // pred_fallthru
      _
    // Predicated region
    $region126: #{vqa_forward.1} parent=1 // pred_check
      _
    $region127: #{vqa_forward.1} parent=1 // pred_check_branch
      %144 = sbr.rel (0) target = $region129
    $region128: #{vqa_forward.1} parent=1 // pred_region
      _
    $region129: #{vqa_forward.1} parent=1 // pred_fallthru
      _
    // Predicated region
    $region130: #{vqa_forward.1} parent=1 // pred_check
      _
    $region131: #{vqa_forward.1} parent=1 // pred_check_branch
      %146 = sbr.rel (0) target = $region133
    $region132: #{vqa_forward.1} parent=1 // pred_region
      _
    $region133: #{vqa_forward.1} parent=1 // pred_fallthru
      _
    // Predicated region
    $region134: #{vqa_forward.1} parent=1 // pred_check
      _
    $region135: #{vqa_forward.1} parent=1 // pred_check_branch
      %148 = sbr.rel (0) target = $region137
    $region136: #{vqa_forward.1} parent=1 // pred_region
      _
    $region137: #{vqa_forward.1} parent=1 // pred_fallthru
      _
    // Predicated region
    $region138: #{vqa_forward.1} parent=1 // pred_check
      _
    $region139: #{vqa_forward.1} parent=1 // pred_check_branch
      %150 = sbr.rel (0) target = $region141
    $region140: #{vqa_forward.1} parent=1 // pred_region
      _
    $region141: #{vqa_forward.1} parent=1 // pred_fallthru
      _
    // Predicated region
    $region142: #{vqa_forward.1} parent=1 // pred_check
      _
    $region143: #{vqa_forward.1} parent=1 // pred_check_branch
      %152 = sbr.rel (0) target = $region145
    $region144: #{vqa_forward.1} parent=1 // pred_region
      _
    $region145: #{vqa_forward.1} parent=1 // pred_fallthru
      _
    // Predicated region
    $region146: #{vqa_forward.1} parent=1 // pred_check
      _
    $region147: #{vqa_forward.1} parent=1 // pred_check_branch
      %154 = sbr.rel (0) target = $region149
    $region148: #{vqa_forward.1} parent=1 // pred_region
      _
    $region149: #{vqa_forward.1} parent=1 // pred_fallthru
      _
    %v156 = vld [vmem:[%s1] sm:$0xf]
    %v157 = vld [vmem:[%s1 + $0x4] sm:$0xf]
    %v158 = vunpack.c.l.bf16 %v156
    %v159 = vunpack.c.l.bf16 %v157
    %v160 = vld [vmem:[%s3] sm:$0xff]
    %v161 = vadd.f32 %v158, %v160
    %v162 = vadd.f32 %v159, %v160
    %v163 = vld [vmem:[%s5] sm:$0x1]
    %v164 = vld [vmem:[%s7] sm:$0x1]
    %v165 = vld [vmem:[%s9] sm:$0xf]
    %v166 = vld [vmem:[%s9 + $0x4] sm:$0xf]
    %v167 = vld [vmem:[%s9 + $0x8] sm:$0xf]
    %v168 = vld [vmem:[%s9 + $0xc] sm:$0xf]
    %v169 = vld [vmem:[%s11] sm:$0x1]
    %v170 = vld [vmem:[%s13] sm:$0xf]
    %v171 = vld [vmem:[%s13 + $0x4] sm:$0xf]
    %v172 = vld [vmem:[%s13 + $0x8] sm:$0xf]
    %v173 = vld [vmem:[%s13 + $0xc] sm:$0xf]
    %v174 = vld [vmem:[%s15] sm:$0x1]
    %v175 = vld [vmem:[%s17] sm:$0x1]
    %v176 = vld [vmem:[%s19] sm:$0x1]
    %v177 = vld [vmem:[%s21] sm:$0xf]
    %v178 = vld [vmem:[%s21 + $0x4] sm:$0xf]
    %v179 = vld [vmem:[%s21 + $0x8] sm:$0xf]
    %v180 = vld [vmem:[%s21 + $0xc] sm:$0xf]
    %v181 = vld [vmem:[%s23] sm:$0x1]
    %v182 = vld [vmem:[%s25] sm:$0xf]
    %v183 = vld [vmem:[%s25 + $0x4] sm:$0xf]
    %v184 = vld [vmem:[%s25 + $0x8] sm:$0xf]
    %v185 = vld [vmem:[%s25 + $0xc] sm:$0xf]
    %v186 = vld [vmem:[%s25 + $0x10] sm:$0xf]
    %v187 = vld [vmem:[%s25 + $0x14] sm:$0xf]
    %v188 = vld [vmem:[%s25 + $0x18] sm:$0xf]
    %v189 = vld [vmem:[%s25 + $0x1c] sm:$0xf]
    %v190 = vld [vmem:[%s27] sm:$0x1]
    %vm191 = vcmask 261120
    %v192 = vsel %vm191, %v161, 0.0
    %193 = vadd.xlane.f32.xlu0 %v192
    %v194 = vpop.xlane.xlu0 %193
    %v195 = vsel %vm191, %v162, 0.0
    %196 = vadd.xlane.f32.xlu0 %v195
    %v197 = vpop.xlane.xlu0 %196
    %v198 = vrcp.pop 32.0
    %v199 = vmul.f32 %v194, %v198
    %v200 = vmul.f32 %v197, %v198
    %v201 = vsub.f32 %v161, %v199
    %v202 = vsub.f32 %v162, %v200
    %v203 = vmul.f32 %v201, %v201
    %v204 = vmul.f32 %v202, %v202
    %v205 = vsel %vm191, %v203, 0.0
    %206 = vadd.xlane.f32.xlu0 %v205
    %v207 = vpop.xlane.xlu0 %206
    %v208 = vsel %vm191, %v204, 0.0
    %209 = vadd.xlane.f32.xlu0 %v208
    %v210 = vpop.xlane.xlu0 %209
    %v211 = vmul.f32 %v207, %v198
    %v212 = vmul.f32 %v210, %v198
    %v213 = vadd.f32 %v211, 1e-05
    %v214 = vadd.f32 %v212, 1e-05
    %v215 = vrsqrt.pop %v213
    %v216 = vrsqrt.pop %v214
    %v217 = vmul.f32 %v201, %v215
    %v218 = vmul.f32 %v202, %v216
    %v220 = vlaneseq
    %v221 = vshrl.u32 %v220, 7
    %v222 = vsub.s32 0, %v221
    %v223 = vrot.slane %v163, %v222
    %v225 = vmul.f32 %v217, %v223
    %v226 = vmul.f32 %v218, %v223
    %v228 = vlaneseq
    %v229 = vshrl.u32 %v228, 7
    %v230 = vsub.s32 0, %v229
    %v231 = vrot.slane %v164, %v230
    %v233 = vadd.f32 %v225, %v231
    %v234 = vadd.f32 %v226, %v231
    %v235 = vpack.c.bf16 %v234, %v233
    %v237 = vlaneseq
    %v238 = vshrl.u32 %v237, 7
    %v239 = vsub.s32 0, %v238
    %v240 = vrot.slane %v169, %v239
    %v246 = vunpack.c.l.b16 %v165
    %v247 = vunpack.c.l.b16 %v166
    %v248 = vunpack.c.l.b16 %v167
    %v249 = vunpack.c.l.b16 %v168
    %v250 = vpack.c.b16 %v247, %v246
    %v251 = vpack.c.b16 %v249, %v248
    %v255 = vsel %vm191, %v235, 0
    %257 = vmatprep.subr.bf16.mxu0 0
    %258 = vmatpush1.bf16.msra.mxu0 %v250
    %259 = vmatprep.subr.bf16.mxu0 0
    %260 = vmatpush1.bf16.msra.mxu0 %v251
    %261 = vmatprep.subr.bf16.mxu0 0
    %262 = vmatpush1.bf16.msra.mxu0 0
    %263 = vmatprep.subr.bf16.mxu0 0
    %264 = vmatpush1.bf16.msra.mxu0 0
    %265 = vmatprep.subr.bf16.mxu0 0
    %266 = vmatpush1.bf16.msra.mxu0 0
    %267 = vmatprep.subr.bf16.mxu0 0
    %268 = vmatpush1.bf16.msra.mxu0 0
    %269 = vmatprep.subr.bf16.mxu0 0
    %270 = vmatpush1.bf16.msra.mxu0 0
    %271 = vmatprep.subr.bf16.mxu0 0
    %272 = vmatpush1.bf16.msra.mxu0 0
    %273 = vmatprep.subr.bf16.mxu0 0
    %274 = vmatpush1.bf16.msra.mxu0 0
    %275 = vmatprep.subr.bf16.mxu0 0
    %276 = vmatpush1.bf16.msra.mxu0 0
    %277 = vmatprep.subr.bf16.mxu0 0
    %278 = vmatpush1.bf16.msra.mxu0 0
    %279 = vmatprep.subr.bf16.mxu0 0
    %280 = vmatpush1.bf16.msra.mxu0 0
    %281 = vmatprep.subr.bf16.mxu0 0
    %282 = vmatpush1.bf16.msra.mxu0 0
    %283 = vmatprep.subr.bf16.mxu0 0
    %284 = vmatpush1.bf16.msra.mxu0 0
    %285 = vmatprep.subr.bf16.mxu0 0
    %286 = vmatpush1.bf16.msra.mxu0 0
    %287 = vmatprep.subr.bf16.mxu0 0
    %288 = vmatpush1.bf16.msra.mxu0 0
    %289 = vmatprep.mubr.bf16.mxu0 0
    %290 = vmatmul.mubr.bf16.gmra.mrb[0].mxu0 %v255
    %v291 = vpop.f32.mrb[0].mxu0
    %v292 = vadd.f32 %v240, %v291
    %v293 = vpop.f32.mrb[0].mxu0
    %v294 = vpop.f32.mrb[0].mxu0
    %v295 = vadd.f32 %v240, %v294
    %v296 = vpop.f32.mrb[0].mxu0
    %297 = vdwg.mxu0
    %v298 = vmul.f32 %v292, 0.17677669
    %v299 = vmul.f32 %v295, 0.17677669
    %v300 = vpack.c.bf16 %v298, %v298
    %v301 = vpack.c.bf16 %v299, %v299
    %v302 = vpack.c.bf16 %v292, %v292
    %v303 = vpack.c.bf16 %v295, %v295
    %305 = vrot.lane.b32.xlu0 %v302, 96
    %v306 = vpop.permute.xlu0 %305
    %v308 = vsel %vm191, %v300, 0
    %v311 = vsel %vm191, %v306, 0
    %313 = vmatprep.subr.bf16.mxu0 0
    %314 = vmatpush1.bf16.xpose.msra.mxu0 %v311
    %315 = vmatprep.subr.bf16.mxu0 0
    %316 = vmatpush1.bf16.xpose.msra.mxu0 0
    %317 = vmatprep.subr.bf16.mxu0 0
    %318 = vmatpush1.bf16.xpose.msra.mxu0 0
    %319 = vmatprep.subr.bf16.mxu0 0
    %320 = vmatpush1.bf16.xpose.msra.mxu0 0
    %321 = vmatprep.subr.bf16.mxu0 0
    %322 = vmatpush1.bf16.xpose.msra.mxu0 0
    %323 = vmatprep.subr.bf16.mxu0 0
    %324 = vmatpush1.bf16.xpose.msra.mxu0 0
    %325 = vmatprep.subr.bf16.mxu0 0
    %326 = vmatpush1.bf16.xpose.msra.mxu0 0
    %327 = vmatprep.subr.bf16.mxu0 0
    %328 = vmatpush1.bf16.xpose.msra.mxu0 0
    %329 = vmatprep.subr.bf16.mxu0 0
    %330 = vmatpush1.bf16.xpose.msra.mxu0 0
    %331 = vmatprep.subr.bf16.mxu0 0
    %332 = vmatpush1.bf16.xpose.msra.mxu0 0
    %333 = vmatprep.subr.bf16.mxu0 0
    %334 = vmatpush1.bf16.xpose.msra.mxu0 0
    %335 = vmatprep.subr.bf16.mxu0 0
    %336 = vmatpush1.bf16.xpose.msra.mxu0 0
    %337 = vmatprep.subr.bf16.mxu0 0
    %338 = vmatpush1.bf16.xpose.msra.mxu0 0
    %339 = vmatprep.subr.bf16.mxu0 0
    %340 = vmatpush1.bf16.xpose.msra.mxu0 0
    %341 = vmatprep.subr.bf16.mxu0 0
    %342 = vmatpush1.bf16.xpose.msra.mxu0 0
    %343 = vmatprep.subr.bf16.mxu0 0
    %344 = vmatpush1.bf16.xpose.msra.mxu0 0
    %345 = vmatprep.mubr.bf16.mxu0 0
    %346 = vmatmul.mubr.bf16.gmra.mrb[0].mxu0 %v308
    %v347 = vpop.f32.mrb[0].mxu0
    %v348 = vadd.f32 0.0, %v347
    %v349 = vpop.f32.mrb[0].mxu0
    %v350 = vpop.f32.mrb[0].mxu0
    %v351 = vpop.f32.mrb[0].mxu0
    %352 = vdwg.mxu0
    %354 = vrot.lane.b32.xlu0 %v303, 96
    %v355 = vpop.permute.xlu0 %354
    %v357 = vsel %vm191, %v301, 0
    %v360 = vsel %vm191, %v355, 0
    %362 = vmatprep.subr.bf16.mxu0 0
    %363 = vmatpush1.bf16.xpose.msra.mxu0 %v360
    %364 = vmatprep.subr.bf16.mxu0 0
    %365 = vmatpush1.bf16.xpose.msra.mxu0 0
    %366 = vmatprep.subr.bf16.mxu0 0
    %367 = vmatpush1.bf16.xpose.msra.mxu0 0
    %368 = vmatprep.subr.bf16.mxu0 0
    %369 = vmatpush1.bf16.xpose.msra.mxu0 0
    %370 = vmatprep.subr.bf16.mxu0 0
    %371 = vmatpush1.bf16.xpose.msra.mxu0 0
    %372 = vmatprep.subr.bf16.mxu0 0
    %373 = vmatpush1.bf16.xpose.msra.mxu0 0
    %374 = vmatprep.subr.bf16.mxu0 0
    %375 = vmatpush1.bf16.xpose.msra.mxu0 0
    %376 = vmatprep.subr.bf16.mxu0 0
    %377 = vmatpush1.bf16.xpose.msra.mxu0 0
    %378 = vmatprep.subr.bf16.mxu0 0
    %379 = vmatpush1.bf16.xpose.msra.mxu0 0
    %380 = vmatprep.subr.bf16.mxu0 0
    %381 = vmatpush1.bf16.xpose.msra.mxu0 0
    %382 = vmatprep.subr.bf16.mxu0 0
    %383 = vmatpush1.bf16.xpose.msra.mxu0 0
    %384 = vmatprep.subr.bf16.mxu0 0
    %385 = vmatpush1.bf16.xpose.msra.mxu0 0
    %386 = vmatprep.subr.bf16.mxu0 0
    %387 = vmatpush1.bf16.xpose.msra.mxu0 0
    %388 = vmatprep.subr.bf16.mxu0 0
    %389 = vmatpush1.bf16.xpose.msra.mxu0 0
    %390 = vmatprep.subr.bf16.mxu0 0
    %391 = vmatpush1.bf16.xpose.msra.mxu0 0
    %392 = vmatprep.subr.bf16.mxu0 0
    %393 = vmatpush1.bf16.xpose.msra.mxu0 0
    %394 = vmatprep.mubr.bf16.mxu0 0
    %395 = vmatmul.mubr.bf16.gmra.mrb[0].mxu0 %v357
    %v396 = vpop.f32.mrb[0].mxu0
    %v397 = vadd.f32 0.0, %v396
    %v398 = vpop.f32.mrb[0].mxu0
    %v399 = vpop.f32.mrb[0].mxu0
    %v400 = vpop.f32.mrb[0].mxu0
    %401 = vdwg.mxu0
    %vm402 = vcmask 64512
    %v403 = vsel %vm402, %v348, -inf
    %404 = vmax.xlane.f32.xlu0 %v403
    %v405 = vpop.xlane.xlu0 %404
    %v406 = vsel %vm402, %v397, -inf
    %407 = vmax.xlane.f32.xlu0 %v406
    %v408 = vpop.xlane.xlu0 %407
    %v409 = vsub.f32 %v348, %v405
    %v410 = vsub.f32 %v397, %v408
    %v411 = vmul.f32 %v409, 1.442695
    %v412 = vpow.pop %v411
    %v413 = vmul.f32 %v410, 1.442695
    %v414 = vpow.pop %v413
    %v415 = vsel %vm402, %v412, 0.0
    %416 = vadd.xlane.f32.xlu0 %v415
    %v417 = vpop.xlane.xlu0 %416
    %v418 = vsel %vm402, %v414, 0.0
    %419 = vadd.xlane.f32.xlu0 %v418
    %v420 = vpop.xlane.xlu0 %419
    %v421 = vrcp.pop %v417
    %v422 = vrcp.pop %v420
    %v423 = vmul.f32 %v412, %v421
    %v424 = vmul.f32 %v414, %v422
    %v425 = vpack.c.bf16 %v423, %v423
    %v426 = vpack.c.bf16 %v424, %v424
    %427 = vrot.lane.b32.xlu0 %v302, 64
    %v428 = vpop.permute.xlu0 %427
    %v430 = vsel %vm402, %v425, 0
    %vm432 = vcmask 1043456
    %v434 = vsel %vm432, %v428, 0
    %436 = vmatprep.subr.bf16.mxu0 0
    %437 = vmatpush1.bf16.msra.mxu0 %v434
    %438 = vmatprep.subr.bf16.mxu0 0
    %439 = vmatpush1.bf16.msra.mxu0 0
    %440 = vmatprep.subr.bf16.mxu0 0
    %441 = vmatpush1.bf16.msra.mxu0 0
    %442 = vmatprep.subr.bf16.mxu0 0
    %443 = vmatpush1.bf16.msra.mxu0 0
    %444 = vmatprep.subr.bf16.mxu0 0
    %445 = vmatpush1.bf16.msra.mxu0 0
    %446 = vmatprep.subr.bf16.mxu0 0
    %447 = vmatpush1.bf16.msra.mxu0 0
    %448 = vmatprep.subr.bf16.mxu0 0
    %449 = vmatpush1.bf16.msra.mxu0 0
    %450 = vmatprep.subr.bf16.mxu0 0
    %451 = vmatpush1.bf16.msra.mxu0 0
    %452 = vmatprep.subr.bf16.mxu0 0
    %453 = vmatpush1.bf16.msra.mxu0 0
    %454 = vmatprep.subr.bf16.mxu0 0
    %455 = vmatpush1.bf16.msra.mxu0 0
    %456 = vmatprep.subr.bf16.mxu0 0
    %457 = vmatpush1.bf16.msra.mxu0 0
    %458 = vmatprep.subr.bf16.mxu0 0
    %459 = vmatpush1.bf16.msra.mxu0 0
    %460 = vmatprep.subr.bf16.mxu0 0
    %461 = vmatpush1.bf16.msra.mxu0 0
    %462 = vmatprep.subr.bf16.mxu0 0
    %463 = vmatpush1.bf16.msra.mxu0 0
    %464 = vmatprep.subr.bf16.mxu0 0
    %465 = vmatpush1.bf16.msra.mxu0 0
    %466 = vmatprep.subr.bf16.mxu0 0
    %467 = vmatpush1.bf16.msra.mxu0 0
    %468 = vmatprep.mubr.bf16.mxu0 0
    %469 = vmatmul.mubr.bf16.gmra.mrb[0].mxu0 %v430
    %v470 = vpop.f32.mrb[0].mxu0
    %v471 = vadd.f32 0.0, %v470
    %v472 = vpop.f32.mrb[0].mxu0
    %v473 = vpop.f32.mrb[0].mxu0
    %v474 = vpop.f32.mrb[0].mxu0
    %475 = vdwg.mxu0
    %476 = vrot.lane.b32.xlu0 %v303, 64
    %v477 = vpop.permute.xlu0 %476
    %v479 = vsel %vm402, %v426, 0
    %v482 = vsel %vm432, %v477, 0
    %484 = vmatprep.subr.bf16.mxu0 0
    %485 = vmatpush1.bf16.msra.mxu0 %v482
    %486 = vmatprep.subr.bf16.mxu0 0
    %487 = vmatpush1.bf16.msra.mxu0 0
    %488 = vmatprep.subr.bf16.mxu0 0
    %489 = vmatpush1.bf16.msra.mxu0 0
    %490 = vmatprep.subr.bf16.mxu0 0
    %491 = vmatpush1.bf16.msra.mxu0 0
    %492 = vmatprep.subr.bf16.mxu0 0
    %493 = vmatpush1.bf16.msra.mxu0 0
    %494 = vmatprep.subr.bf16.mxu0 0
    %495 = vmatpush1.bf16.msra.mxu0 0
    %496 = vmatprep.subr.bf16.mxu0 0
    %497 = vmatpush1.bf16.msra.mxu0 0
    %498 = vmatprep.subr.bf16.mxu0 0
    %499 = vmatpush1.bf16.msra.mxu0 0
    %500 = vmatprep.subr.bf16.mxu0 0
    %501 = vmatpush1.bf16.msra.mxu0 0
    %502 = vmatprep.subr.bf16.mxu0 0
    %503 = vmatpush1.bf16.msra.mxu0 0
    %504 = vmatprep.subr.bf16.mxu0 0
    %505 = vmatpush1.bf16.msra.mxu0 0
    %506 = vmatprep.subr.bf16.mxu0 0
    %507 = vmatpush1.bf16.msra.mxu0 0
    %508 = vmatprep.subr.bf16.mxu0 0
    %509 = vmatpush1.bf16.msra.mxu0 0
    %510 = vmatprep.subr.bf16.mxu0 0
    %511 = vmatpush1.bf16.msra.mxu0 0
    %512 = vmatprep.subr.bf16.mxu0 0
    %513 = vmatpush1.bf16.msra.mxu0 0
    %514 = vmatprep.subr.bf16.mxu0 0
    %515 = vmatpush1.bf16.msra.mxu0 0
    %516 = vmatprep.mubr.bf16.mxu0 0
    %517 = vmatmul.mubr.bf16.gmra.mrb[0].mxu0 %v479
    %v518 = vpop.f32.mrb[0].mxu0
    %v519 = vadd.f32 0.0, %v518
    %v520 = vpop.f32.mrb[0].mxu0
    %v521 = vpop.f32.mrb[0].mxu0
    %v522 = vpop.f32.mrb[0].mxu0
    %523 = vdwg.mxu0
    %v524 = vpack.c.bf16 %v519, %v471
    %v526 = vlaneseq
    %v527 = vshrl.u32 %v526, 7
    %v528 = vsub.s32 0, %v527
    %v529 = vrot.slane %v174, %v528
    %v535 = vunpack.c.l.b16 %v170
    %v536 = vunpack.c.l.b16 %v171
    %v537 = vunpack.c.l.b16 %v172
    %v538 = vunpack.c.l.b16 %v173
    %v539 = vpack.c.b16 %v536, %v535
    %v540 = vpack.c.b16 %v538, %v537
    %v544 = vsel %vm191, %v524, 0
    %546 = vmatprep.subr.bf16.mxu0 0
    %547 = vmatpush1.bf16.msra.mxu0 %v539
    %548 = vmatprep.subr.bf16.mxu0 0
    %549 = vmatpush1.bf16.msra.mxu0 %v540
    %550 = vmatprep.subr.bf16.mxu0 0
    %551 = vmatpush1.bf16.msra.mxu0 0
    %552 = vmatprep.subr.bf16.mxu0 0
    %553 = vmatpush1.bf16.msra.mxu0 0
    %554 = vmatprep.subr.bf16.mxu0 0
    %555 = vmatpush1.bf16.msra.mxu0 0
    %556 = vmatprep.subr.bf16.mxu0 0
    %557 = vmatpush1.bf16.msra.mxu0 0
    %558 = vmatprep.subr.bf16.mxu0 0
    %559 = vmatpush1.bf16.msra.mxu0 0
    %560 = vmatprep.subr.bf16.mxu0 0
    %561 = vmatpush1.bf16.msra.mxu0 0
    %562 = vmatprep.subr.bf16.mxu0 0
    %563 = vmatpush1.bf16.msra.mxu0 0
    %564 = vmatprep.subr.bf16.mxu0 0
    %565 = vmatpush1.bf16.msra.mxu0 0
    %566 = vmatprep.subr.bf16.mxu0 0
    %567 = vmatpush1.bf16.msra.mxu0 0
    %568 = vmatprep.subr.bf16.mxu0 0
    %569 = vmatpush1.bf16.msra.mxu0 0
    %570 = vmatprep.subr.bf16.mxu0 0
    %571 = vmatpush1.bf16.msra.mxu0 0
    %572 = vmatprep.subr.bf16.mxu0 0
    %573 = vmatpush1.bf16.msra.mxu0 0
    %574 = vmatprep.subr.bf16.mxu0 0
    %575 = vmatpush1.bf16.msra.mxu0 0
    %576 = vmatprep.subr.bf16.mxu0 0
    %577 = vmatpush1.bf16.msra.mxu0 0
    %578 = vmatprep.mubr.bf16.mxu0 0
    %579 = vmatmul.mubr.bf16.gmra.mrb[0].mxu0 %v544
    %v580 = vpop.f32.mrb[0].mxu0
    %v581 = vadd.f32 %v529, %v580
    %v582 = vpop.f32.mrb[0].mxu0
    %v583 = vpop.f32.mrb[0].mxu0
    %v584 = vadd.f32 %v529, %v583
    %v585 = vpop.f32.mrb[0].mxu0
    %586 = vdwg.mxu0
    %v587 = vadd.f32 %v161, %v581
    %v588 = vadd.f32 %v162, %v584
    %v589 = vsel %vm191, %v587, 0.0
    %590 = vadd.xlane.f32.xlu0 %v589
    %v591 = vpop.xlane.xlu0 %590
    %v592 = vsel %vm191, %v588, 0.0
    %593 = vadd.xlane.f32.xlu0 %v592
    %v594 = vpop.xlane.xlu0 %593
    %v595 = vmul.f32 %v591, %v198
    %v596 = vmul.f32 %v594, %v198
    %v597 = vsub.f32 %v587, %v595
    %v598 = vsub.f32 %v588, %v596
    %v599 = vmul.f32 %v597, %v597
    %v600 = vmul.f32 %v598, %v598
    %v601 = vsel %vm191, %v599, 0.0
    %602 = vadd.xlane.f32.xlu0 %v601
    %v603 = vpop.xlane.xlu0 %602
    %v604 = vsel %vm191, %v600, 0.0
    %605 = vadd.xlane.f32.xlu0 %v604
    %v606 = vpop.xlane.xlu0 %605
    %v607 = vmul.f32 %v603, %v198
    %v608 = vmul.f32 %v606, %v198
    %v609 = vadd.f32 %v607, 1e-05
    %v610 = vadd.f32 %v608, 1e-05
    %v611 = vrsqrt.pop %v609
    %v612 = vrsqrt.pop %v610
    %v613 = vmul.f32 %v597, %v611
    %v614 = vmul.f32 %v598, %v612
    %v616 = vlaneseq
    %v617 = vshrl.u32 %v616, 7
    %v618 = vsub.s32 0, %v617
    %v619 = vrot.slane %v175, %v618
    %v621 = vmul.f32 %v613, %v619
    %v622 = vmul.f32 %v614, %v619
    %v624 = vlaneseq
    %v625 = vshrl.u32 %v624, 7
    %v626 = vsub.s32 0, %v625
    %v627 = vrot.slane %v176, %v626
    %v629 = vadd.f32 %v621, %v627
    %v630 = vadd.f32 %v622, %v627
    %v631 = vpack.c.bf16 %v630, %v629
    %v633 = vlaneseq
    %v634 = vshrl.u32 %v633, 7
    %v635 = vsub.s32 0, %v634
    %v636 = vrot.slane %v181, %v635
    %v642 = vunpack.c.l.b16 %v177
    %v643 = vunpack.c.l.b16 %v178
    %v644 = vunpack.c.l.b16 %v179
    %v645 = vunpack.c.l.b16 %v180
    %v646 = vpack.c.b16 %v643, %v642
    %v647 = vpack.c.b16 %v645, %v644
    %v651 = vsel %vm191, %v631, 0
    %653 = vmatprep.subr.bf16.mxu0 0
    %654 = vmatpush1.bf16.msra.mxu0 %v646
    %655 = vmatprep.subr.bf16.mxu0 0
    %656 = vmatpush1.bf16.msra.mxu0 %v647
    %657 = vmatprep.subr.bf16.mxu0 0
    %658 = vmatpush1.bf16.msra.mxu0 0
    %659 = vmatprep.subr.bf16.mxu0 0
    %660 = vmatpush1.bf16.msra.mxu0 0
    %661 = vmatprep.subr.bf16.mxu0 0
    %662 = vmatpush1.bf16.msra.mxu0 0
    %663 = vmatprep.subr.bf16.mxu0 0
    %664 = vmatpush1.bf16.msra.mxu0 0
    %665 = vmatprep.subr.bf16.mxu0 0
    %666 = vmatpush1.bf16.msra.mxu0 0
    %667 = vmatprep.subr.bf16.mxu0 0
    %668 = vmatpush1.bf16.msra.mxu0 0
    %669 = vmatprep.subr.bf16.mxu0 0
    %670 = vmatpush1.bf16.msra.mxu0 0
    %671 = vmatprep.subr.bf16.mxu0 0
    %672 = vmatpush1.bf16.msra.mxu0 0
    %673 = vmatprep.subr.bf16.mxu0 0
    %674 = vmatpush1.bf16.msra.mxu0 0
    %675 = vmatprep.subr.bf16.mxu0 0
    %676 = vmatpush1.bf16.msra.mxu0 0
    %677 = vmatprep.subr.bf16.mxu0 0
    %678 = vmatpush1.bf16.msra.mxu0 0
    %679 = vmatprep.subr.bf16.mxu0 0
    %680 = vmatpush1.bf16.msra.mxu0 0
    %681 = vmatprep.subr.bf16.mxu0 0
    %682 = vmatpush1.bf16.msra.mxu0 0
    %683 = vmatprep.subr.bf16.mxu0 0
    %684 = vmatpush1.bf16.msra.mxu0 0
    %685 = vmatprep.mubr.bf16.mxu0 0
    %686 = vmatmul.mubr.bf16.gmra.mrb[0].mxu0 %v651
    %v687 = vpop.f32.mrb[0].mxu0
    %v688 = vadd.f32 %v636, %v687
    %v689 = vpop.f32.mrb[0].mxu0
    %v690 = vpop.f32.mrb[0].mxu0
    %v691 = vadd.f32 %v636, %v690
    %v692 = vpop.f32.mrb[0].mxu0
    %693 = vdwg.mxu0
    %v694 = vmul.f32 %v688, %v688
    %v695 = vmul.f32 %v691, %v691
    %v696 = vmul.f32 %v688, %v694
    %v697 = vmul.f32 %v691, %v695
    %v698 = vmul.f32 %v696, 0.044715
    %v699 = vmul.f32 %v697, 0.044715
    %v700 = vadd.f32 %v688, %v698
    %v701 = vadd.f32 %v691, %v699
    %v702 = vmul.f32 %v700, 0.7978846
    %v703 = vmul.f32 %v701, 0.7978846
    %v704 = vtanh.pop %v702
    %v705 = vtanh.pop %v703
    %v706 = vadd.f32 %v704, 1.0
    %v707 = vadd.f32 %v705, 1.0
    %v708 = vmul.f32 %v706, 0.5
    %v709 = vmul.f32 %v707, 0.5
    %v710 = vmul.f32 %v688, %v708
    %v711 = vmul.f32 %v691, %v709
    %v712 = vpack.c.bf16 %v711, %v710
    %v714 = vlaneseq
    %v715 = vshrl.u32 %v714, 7
    %v716 = vsub.s32 0, %v715
    %v717 = vrot.slane %v190, %v716
    %v727 = vunpack.c.l.b16 %v182
    %v728 = vunpack.c.l.b16 %v183
    %v729 = vunpack.c.l.b16 %v184
    %v730 = vunpack.c.l.b16 %v185
    %v731 = vunpack.c.l.b16 %v186
    %v732 = vunpack.c.l.b16 %v187
    %v733 = vunpack.c.l.b16 %v188
    %v734 = vunpack.c.l.b16 %v189
    %v735 = vpack.c.b16 %v728, %v727
    %v736 = vpack.c.b16 %v730, %v729
    %v737 = vpack.c.b16 %v732, %v731
    %v738 = vpack.c.b16 %v734, %v733
    %vm743 = vcmask 523264
    %v745 = vsel %vm743, %v712, 0
    %747 = vmatprep.subr.bf16.mxu0 0
    %748 = vmatpush1.bf16.msra.mxu0 %v735
    %749 = vmatprep.subr.bf16.mxu0 0
    %750 = vmatpush1.bf16.msra.mxu0 %v736
    %751 = vmatprep.subr.bf16.mxu0 0
    %752 = vmatpush1.bf16.msra.mxu0 %v737
    %753 = vmatprep.subr.bf16.mxu0 0
    %754 = vmatpush1.bf16.msra.mxu0 %v738
    %755 = vmatprep.subr.bf16.mxu0 0
    %756 = vmatpush1.bf16.msra.mxu0 0
    %757 = vmatprep.subr.bf16.mxu0 0
    %758 = vmatpush1.bf16.msra.mxu0 0
    %759 = vmatprep.subr.bf16.mxu0 0
    %760 = vmatpush1.bf16.msra.mxu0 0
    %761 = vmatprep.subr.bf16.mxu0 0
    %762 = vmatpush1.bf16.msra.mxu0 0
    %763 = vmatprep.subr.bf16.mxu0 0
    %764 = vmatpush1.bf16.msra.mxu0 0
    %765 = vmatprep.subr.bf16.mxu0 0
    %766 = vmatpush1.bf16.msra.mxu0 0
    %767 = vmatprep.subr.bf16.mxu0 0
    %768 = vmatpush1.bf16.msra.mxu0 0
    %769 = vmatprep.subr.bf16.mxu0 0
    %770 = vmatpush1.bf16.msra.mxu0 0
    %771 = vmatprep.subr.bf16.mxu0 0
    %772 = vmatpush1.bf16.msra.mxu0 0
    %773 = vmatprep.subr.bf16.mxu0 0
    %774 = vmatpush1.bf16.msra.mxu0 0
    %775 = vmatprep.subr.bf16.mxu0 0
    %776 = vmatpush1.bf16.msra.mxu0 0
    %777 = vmatprep.subr.bf16.mxu0 0
    %778 = vmatpush1.bf16.msra.mxu0 0
    %779 = vmatprep.mubr.bf16.mxu0 0
    %780 = vmatmul.mubr.bf16.gmra.mrb[0].mxu0 %v745
    %v781 = vpop.f32.mrb[0].mxu0
    %v782 = vadd.f32 %v717, %v781
    %v783 = vpop.f32.mrb[0].mxu0
    %v784 = vpop.f32.mrb[0].mxu0
    %v785 = vadd.f32 %v717, %v784
    %v786 = vpop.f32.mrb[0].mxu0
    %787 = vdwg.mxu0
    %v788 = vadd.f32 %v587, %v782
    %v789 = vadd.f32 %v588, %v785
    %v790 = vld [vmem:[%s29] sm:$0xf]
    %v791 = vld [vmem:[%s29 + $0x4] sm:$0xf]
    %v792 = vld [vmem:[%s29 + $0x8] sm:$0xf]
    %v793 = vld [vmem:[%s29 + $0xc] sm:$0xf]
    %v794 = vpack.c.bf16 %v788, %v788
    %v795 = vpack.c.bf16 %v789, %v789
    %v796 = vld [vmem:[%s31] sm:$0x1]
    %v798 = vlaneseq
    %v799 = vshrl.u32 %v798, 7
    %v800 = vsub.s32 0, %v799
    %v801 = vrot.slane %v796, %v800
    %v805 = vunpack.c.l.b16 %v794
    %v806 = vunpack.c.l.b16 %v795
    %v807 = vrot.slane %v806, 7
    %vm808 = vcmask 1041409
    %v809 = vsel %vm808, %v807, %v805
    %v810 = vpack.c.b16 %v809, %v809
    %v815 = vunpack.c.l.b16 %v790
    %v816 = vunpack.c.l.b16 %v791
    %v817 = vunpack.c.l.b16 %v792
    %v818 = vunpack.c.l.b16 %v793
    %v819 = vpack.c.b16 %v816, %v815
    %v820 = vpack.c.b16 %v818, %v817
    %v824 = vsel %vm191, %v810, 0
    %826 = vmatprep.subr.bf16.mxu0 0
    %827 = vmatpush1.bf16.msra.mxu0 %v819
    %828 = vmatprep.subr.bf16.mxu0 0
    %829 = vmatpush1.bf16.msra.mxu0 %v820
    %830 = vmatprep.subr.bf16.mxu0 0
    %831 = vmatpush1.bf16.msra.mxu0 0
    %832 = vmatprep.subr.bf16.mxu0 0
    %833 = vmatpush1.bf16.msra.mxu0 0
    %834 = vmatprep.subr.bf16.mxu0 0
    %835 = vmatpush1.bf16.msra.mxu0 0
    %836 = vmatprep.subr.bf16.mxu0 0
    %837 = vmatpush1.bf16.msra.mxu0 0
    %838 = vmatprep.subr.bf16.mxu0 0
    %839 = vmatpush1.bf16.msra.mxu0 0
    %840 = vmatprep.subr.bf16.mxu0 0
    %841 = vmatpush1.bf16.msra.mxu0 0
    %842 = vmatprep.subr.bf16.mxu0 0
    %843 = vmatpush1.bf16.msra.mxu0 0
    %844 = vmatprep.subr.bf16.mxu0 0
    %845 = vmatpush1.bf16.msra.mxu0 0
    %846 = vmatprep.subr.bf16.mxu0 0
    %847 = vmatpush1.bf16.msra.mxu0 0
    %848 = vmatprep.subr.bf16.mxu0 0
    %849 = vmatpush1.bf16.msra.mxu0 0
    %850 = vmatprep.subr.bf16.mxu0 0
    %851 = vmatpush1.bf16.msra.mxu0 0
    %852 = vmatprep.subr.bf16.mxu0 0
    %853 = vmatpush1.bf16.msra.mxu0 0
    %854 = vmatprep.subr.bf16.mxu0 0
    %855 = vmatpush1.bf16.msra.mxu0 0
    %856 = vmatprep.subr.bf16.mxu0 0
    %857 = vmatpush1.bf16.msra.mxu0 0
    %858 = vmatprep.mubr.bf16.mxu0 0
    %859 = vmatmul.mubr.bf16.gmra.mrb[0].mxu0 %v824
    %v860 = vpop.f32.mrb[0].mxu0
    %v861 = vadd.f32 %v801, %v860
    %v862 = vpop.f32.mrb[0].mxu0
    %v863 = vpop.f32.mrb[0].mxu0
    %v864 = vpop.f32.mrb[0].mxu0
    %865 = vdwg.mxu0
    %v866 = vtanh.pop %v861
    %v867 = vld [vmem:[%s33] sm:$0xff]
    %v868 = vld [vmem:[%s33 + $0x8] sm:$0xff]
    %v869 = vld [vmem:[%s33 + $0x10] sm:$0xff]
    %v870 = vld [vmem:[%s33 + $0x18] sm:$0xff]
    %v871 = vld [vmem:[%s35] sm:$0xf]
    %v872 = vld [vmem:[%s35 + $0x4] sm:$0xf]
    %v873 = vld [vmem:[%s35 + $0x8] sm:$0xf]
    %v874 = vld [vmem:[%s35 + $0xc] sm:$0xf]
    %v875 = vld [vmem:[%s35 + $0x10] sm:$0xf]
    %v876 = vld [vmem:[%s35 + $0x14] sm:$0xf]
    %v877 = vpack.c.bf16 %v868, %v867
    %v878 = vpack.c.bf16 %v870, %v869
    %v879 = vld [vmem:[%s37] sm:$0x1]
    %v881 = vlaneseq
    %v882 = vshrl.u32 %v881, 7
    %v883 = vsub.s32 0, %v882
    %v884 = vrot.slane %v879, %v883
    %v892 = vunpack.c.l.b16 %v871
    %v893 = vunpack.c.l.b16 %v872
    %v894 = vunpack.c.l.b16 %v873
    %v895 = vunpack.c.l.b16 %v874
    %v896 = vunpack.c.l.b16 %v875
    %v897 = vunpack.c.l.b16 %v876
    %v898 = vpack.c.b16 %v893, %v892
    %v899 = vpack.c.b16 %v895, %v894
    %v900 = vpack.c.b16 %v897, %v896
    %vm904 = vcmask 392192
    %v906 = vsel %vm904, %v877, 0
    %v909 = vsel %vm904, %v878, 0
    %911 = vmatprep.subr.bf16.mxu0 0
    %912 = vmatpush1.bf16.msra.mxu0 %v898
    %913 = vmatprep.subr.bf16.mxu0 0
    %914 = vmatpush1.bf16.msra.mxu0 %v899
    %915 = vmatprep.subr.bf16.mxu0 0
    %916 = vmatpush1.bf16.msra.mxu0 %v900
    %917 = vmatprep.subr.bf16.mxu0 0
    %918 = vmatpush1.bf16.msra.mxu0 0
    %919 = vmatprep.subr.bf16.mxu0 0
    %920 = vmatpush1.bf16.msra.mxu0 0
    %921 = vmatprep.subr.bf16.mxu0 0
    %922 = vmatpush1.bf16.msra.mxu0 0
    %923 = vmatprep.subr.bf16.mxu0 0
    %924 = vmatpush1.bf16.msra.mxu0 0
    %925 = vmatprep.subr.bf16.mxu0 0
    %926 = vmatpush1.bf16.msra.mxu0 0
    %927 = vmatprep.subr.bf16.mxu0 0
    %928 = vmatpush1.bf16.msra.mxu0 0
    %929 = vmatprep.subr.bf16.mxu0 0
    %930 = vmatpush1.bf16.msra.mxu0 0
    %931 = vmatprep.subr.bf16.mxu0 0
    %932 = vmatpush1.bf16.msra.mxu0 0
    %933 = vmatprep.subr.bf16.mxu0 0
    %934 = vmatpush1.bf16.msra.mxu0 0
    %935 = vmatprep.subr.bf16.mxu0 0
    %936 = vmatpush1.bf16.msra.mxu0 0
    %937 = vmatprep.subr.bf16.mxu0 0
    %938 = vmatpush1.bf16.msra.mxu0 0
    %939 = vmatprep.subr.bf16.mxu0 0
    %940 = vmatpush1.bf16.msra.mxu0 0
    %941 = vmatprep.subr.bf16.mxu0 0
    %942 = vmatpush1.bf16.msra.mxu0 0
    %943 = vmatprep.mubr.bf16.mxu0 0
    %944 = vmatmul.mubr.bf16.gmra.mrb[0].mxu0 %v906
    %v945 = vpop.f32.mrb[0].mxu0
    %v946 = vadd.f32 %v884, %v945
    %v947 = vpop.f32.mrb[0].mxu0
    %v948 = vpop.f32.mrb[0].mxu0
    %v949 = vadd.f32 %v884, %v948
    %v950 = vpop.f32.mrb[0].mxu0
    %951 = vmatprep.mubr.bf16.mxu0 0
    %952 = vmatmul.mubr.bf16.gmra.mrb[0].mxu0 %v909
    %v953 = vpop.f32.mrb[0].mxu0
    %v954 = vadd.f32 %v884, %v953
    %v955 = vpop.f32.mrb[0].mxu0
    %v956 = vpop.f32.mrb[0].mxu0
    %v957 = vadd.f32 %v884, %v956
    %v958 = vpop.f32.mrb[0].mxu0
    %959 = vdwg.mxu0
    %v960 = vld [vmem:[%s39] sm:$0xff]
    %v961 = vld [vmem:[%s39 + $0x8] sm:$0xff]
    %v962 = vadd.f32 %v946, %v960
    %v963 = vadd.f32 %v949, %v961
    %v964 = vadd.f32 %v954, %v960
    %v965 = vadd.f32 %v957, %v961
    %v966 = vld [vmem:[%s41] sm:$0x1]
    %v967 = vld [vmem:[%s43] sm:$0x1]
    %v968 = vld [vmem:[%s45] sm:$0xf]
    %v969 = vld [vmem:[%s45 + $0x4] sm:$0xf]
    %v970 = vld [vmem:[%s45 + $0x8] sm:$0xf]
    %v971 = vld [vmem:[%s45 + $0xc] sm:$0xf]
    %v972 = vld [vmem:[%s47] sm:$0x1]
    %v973 = vld [vmem:[%s49] sm:$0xf]
    %v974 = vld [vmem:[%s49 + $0x4] sm:$0xf]
    %v975 = vld [vmem:[%s49 + $0x8] sm:$0xf]
    %v976 = vld [vmem:[%s49 + $0xc] sm:$0xf]
    %v977 = vld [vmem:[%s51] sm:$0x1]
    %v978 = vld [vmem:[%s53] sm:$0x1]
    %v979 = vld [vmem:[%s55] sm:$0x1]
    %v980 = vld [vmem:[%s57] sm:$0xf]
    %v981 = vld [vmem:[%s57 + $0x4] sm:$0xf]
    %v982 = vld [vmem:[%s57 + $0x8] sm:$0xf]
    %v983 = vld [vmem:[%s57 + $0xc] sm:$0xf]
    %v984 = vld [vmem:[%s59] sm:$0x1]
    %v985 = vld [vmem:[%s61] sm:$0xf]
    %v986 = vld [vmem:[%s61 + $0x4] sm:$0xf]
    %v987 = vld [vmem:[%s61 + $0x8] sm:$0xf]
    %v988 = vld [vmem:[%s61 + $0xc] sm:$0xf]
    %v989 = vld [vmem:[%s61 + $0x10] sm:$0xf]
    %v990 = vld [vmem:[%s61 + $0x14] sm:$0xf]
    %v991 = vld [vmem:[%s61 + $0x18] sm:$0xf]
    %v992 = vld [vmem:[%s61 + $0x1c] sm:$0xf]
    %v993 = vld [vmem:[%s63] sm:$0x1]
    %v994 = vsel %vm191, %v962, 0.0
    %995 = vadd.xlane.f32.xlu0 %v994
    %v996 = vpop.xlane.xlu0 %995
    %v997 = vsel %vm191, %v963, 0.0
    %998 = vadd.xlane.f32.xlu0 %v997
    %v999 = vpop.xlane.xlu0 %998
    %v1000 = vsel %vm191, %v964, 0.0
    %1001 = vadd.xlane.f32.xlu0 %v1000
    %v1002 = vpop.xlane.xlu0 %1001
    %v1003 = vsel %vm191, %v965, 0.0
    %1004 = vadd.xlane.f32.xlu0 %v1003
    %v1005 = vpop.xlane.xlu0 %1004
    %v1006 = vmul.f32 %v996, %v198
    %v1007 = vmul.f32 %v999, %v198
    %v1008 = vmul.f32 %v1002, %v198
    %v1009 = vmul.f32 %v1005, %v198
    %v1010 = vsub.f32 %v962, %v1006
    %v1011 = vsub.f32 %v963, %v1007
    %v1012 = vsub.f32 %v964, %v1008
    %v1013 = vsub.f32 %v965, %v1009
    %v1014 = vmul.f32 %v1010, %v1010
    %v1015 = vmul.f32 %v1011, %v1011
    %v1016 = vmul.f32 %v1012, %v1012
    %v1017 = vmul.f32 %v1013, %v1013
    %v1018 = vsel %vm191, %v1014, 0.0
    %1019 = vadd.xlane.f32.xlu0 %v1018
    %v1020 = vpop.xlane.xlu0 %1019
    %v1021 = vsel %vm191, %v1015, 0.0
    %1022 = vadd.xlane.f32.xlu0 %v1021
    %v1023 = vpop.xlane.xlu0 %1022
    %v1024 = vsel %vm191, %v1016, 0.0
    %1025 = vadd.xlane.f32.xlu0 %v1024
    %v1026 = vpop.xlane.xlu0 %1025
    %v1027 = vsel %vm191, %v1017, 0.0
    %1028 = vadd.xlane.f32.xlu0 %v1027
    %v1029 = vpop.xlane.xlu0 %1028
    %v1030 = vmul.f32 %v1020, %v198
    %v1031 = vmul.f32 %v1023, %v198
    %v1032 = vmul.f32 %v1026, %v198
    %v1033 = vmul.f32 %v1029, %v198
    %v1034 = vadd.f32 %v1030, 1e-05
    %v1035 = vadd.f32 %v1031, 1e-05
    %v1036 = vadd.f32 %v1032, 1e-05
    %v1037 = vadd.f32 %v1033, 1e-05
    %v1038 = vrsqrt.pop %v1034
    %v1039 = vrsqrt.pop %v1035
    %v1040 = vrsqrt.pop %v1036
    %v1041 = vrsqrt.pop %v1037
    %v1042 = vmul.f32 %v1010, %v1038
    %v1043 = vmul.f32 %v1011, %v1039
    %v1044 = vmul.f32 %v1012, %v1040
    %v1045 = vmul.f32 %v1013, %v1041
    %v1047 = vlaneseq
    %v1048 = vshrl.u32 %v1047, 7
    %v1049 = vsub.s32 0, %v1048
    %v1050 = vrot.slane %v966, %v1049
    %v1052 = vmul.f32 %v1042, %v1050
    %v1053 = vmul.f32 %v1043, %v1050
    %v1054 = vmul.f32 %v1044, %v1050
    %v1055 = vmul.f32 %v1045, %v1050
    %v1057 = vlaneseq
    %v1058 = vshrl.u32 %v1057, 7
    %v1059 = vsub.s32 0, %v1058
    %v1060 = vrot.slane %v967, %v1059
    %v1062 = vadd.f32 %v1052, %v1060
    %v1063 = vadd.f32 %v1053, %v1060
    %v1064 = vadd.f32 %v1054, %v1060
    %v1065 = vadd.f32 %v1055, %v1060
    %v1066 = vpack.c.bf16 %v1063, %v1062
    %v1067 = vpack.c.bf16 %v1065, %v1064
    %v1069 = vlaneseq
    %v1070 = vshrl.u32 %v1069, 7
    %v1071 = vsub.s32 0, %v1070
    %v1072 = vrot.slane %v972, %v1071
    %v1078 = vunpack.c.l.b16 %v968
    %v1079 = vunpack.c.l.b16 %v969
    %v1080 = vunpack.c.l.b16 %v970
    %v1081 = vunpack.c.l.b16 %v971
    %v1082 = vpack.c.b16 %v1079, %v1078
    %v1083 = vpack.c.b16 %v1081, %v1080
    %v1087 = vsel %vm191, %v1066, 0
    %v1090 = vsel %vm191, %v1067, 0
    %1092 = vmatprep.subr.bf16.mxu0 0
    %1093 = vmatpush1.bf16.msra.mxu0 %v1082
    %1094 = vmatprep.subr.bf16.mxu0 0
    %1095 = vmatpush1.bf16.msra.mxu0 %v1083
    %1096 = vmatprep.subr.bf16.mxu0 0
    %1097 = vmatpush1.bf16.msra.mxu0 0
    %1098 = vmatprep.subr.bf16.mxu0 0
    %1099 = vmatpush1.bf16.msra.mxu0 0
    %1100 = vmatprep.subr.bf16.mxu0 0
    %1101 = vmatpush1.bf16.msra.mxu0 0
    %1102 = vmatprep.subr.bf16.mxu0 0
    %1103 = vmatpush1.bf16.msra.mxu0 0
    %1104 = vmatprep.subr.bf16.mxu0 0
    %1105 = vmatpush1.bf16.msra.mxu0 0
    %1106 = vmatprep.subr.bf16.mxu0 0
    %1107 = vmatpush1.bf16.msra.mxu0 0
    %1108 = vmatprep.subr.bf16.mxu0 0
    %1109 = vmatpush1.bf16.msra.mxu0 0
    %1110 = vmatprep.subr.bf16.mxu0 0
    %1111 = vmatpush1.bf16.msra.mxu0 0
    %1112 = vmatprep.subr.bf16.mxu0 0
    %1113 = vmatpush1.bf16.msra.mxu0 0
    %1114 = vmatprep.subr.bf16.mxu0 0
    %1115 = vmatpush1.bf16.msra.mxu0 0
    %1116 = vmatprep.subr.bf16.mxu0 0
    %1117 = vmatpush1.bf16.msra.mxu0 0
    %1118 = vmatprep.subr.bf16.mxu0 0
    %1119 = vmatpush1.bf16.msra.mxu0 0
    %1120 = vmatprep.subr.bf16.mxu0 0
    %1121 = vmatpush1.bf16.msra.mxu0 0
    %1122 = vmatprep.subr.bf16.mxu0 0
    %1123 = vmatpush1.bf16.msra.mxu0 0
    %1124 = vmatprep.mubr.bf16.mxu0 0
    %1125 = vmatmul.mubr.bf16.gmra.mrb[0].mxu0 %v1087
    %v1126 = vpop.f32.mrb[0].mxu0
    %v1127 = vadd.f32 %v1072, %v1126
    %v1128 = vpop.f32.mrb[0].mxu0
    %v1129 = vpop.f32.mrb[0].mxu0
    %v1130 = vadd.f32 %v1072, %v1129
    %v1131 = vpop.f32.mrb[0].mxu0
    %1132 = vmatprep.mubr.bf16.mxu0 0
    %1133 = vmatmul.mubr.bf16.gmra.mrb[0].mxu0 %v1090
    %v1134 = vpop.f32.mrb[0].mxu0
    %v1135 = vadd.f32 %v1072, %v1134
    %v1136 = vpop.f32.mrb[0].mxu0
    %v1137 = vpop.f32.mrb[0].mxu0
    %v1138 = vadd.f32 %v1072, %v1137
    %v1139 = vpop.f32.mrb[0].mxu0
    %1140 = vdwg.mxu0
    %v1141 = vmul.f32 %v1127, 0.17677669
    %v1142 = vmul.f32 %v1130, 0.17677669
    %v1143 = vmul.f32 %v1135, 0.17677669
    %v1144 = vmul.f32 %v1138, 0.17677669
    %v1145 = vpack.c.bf16 %v1142, %v1141
    %v1146 = vpack.c.bf16 %v1144, %v1143
    %v1147 = vpack.c.bf16 %v1130, %v1127
    %v1148 = vpack.c.bf16 %v1138, %v1135
    %1150 = vrot.lane.b32.xlu0 %v1147, 96
    %v1151 = vpop.permute.xlu0 %1150
    %v1153 = vsel %vm191, %v1145, 0
    %v1156 = vsel %vm191, %v1151, 0
    %1158 = vmatprep.subr.bf16.mxu0 0
    %1159 = vmatpush1.bf16.xpose.msra.mxu0 %v1156
    %1160 = vmatprep.subr.bf16.mxu0 0
    %1161 = vmatpush1.bf16.xpose.msra.mxu0 0
    %1162 = vmatprep.subr.bf16.mxu0 0
    %1163 = vmatpush1.bf16.xpose.msra.mxu0 0
    %1164 = vmatprep.subr.bf16.mxu0 0
    %1165 = vmatpush1.bf16.xpose.msra.mxu0 0
    %1166 = vmatprep.subr.bf16.mxu0 0
    %1167 = vmatpush1.bf16.xpose.msra.mxu0 0
    %1168 = vmatprep.subr.bf16.mxu0 0
    %1169 = vmatpush1.bf16.xpose.msra.mxu0 0
    %1170 = vmatprep.subr.bf16.mxu0 0
    %1171 = vmatpush1.bf16.xpose.msra.mxu0 0
    %1172 = vmatprep.subr.bf16.mxu0 0
    %1173 = vmatpush1.bf16.xpose.msra.mxu0 0
    %1174 = vmatprep.subr.bf16.mxu0 0
    %1175 = vmatpush1.bf16.xpose.msra.mxu0 0
    %1176 = vmatprep.subr.bf16.mxu0 0
    %1177 = vmatpush1.bf16.xpose.msra.mxu0 0
    %1178 = vmatprep.subr.bf16.mxu0 0
    %1179 = vmatpush1.bf16.xpose.msra.mxu0 0
    %1180 = vmatprep.subr.bf16.mxu0 0
    %1181 = vmatpush1.bf16.xpose.msra.mxu0 0
    %1182 = vmatprep.subr.bf16.mxu0 0
    %1183 = vmatpush1.bf16.xpose.msra.mxu0 0
    %1184 = vmatprep.subr.bf16.mxu0 0
    %1185 = vmatpush1.bf16.xpose.msra.mxu0 0
    %1186 = vmatprep.subr.bf16.mxu0 0
    %1187 = vmatpush1.bf16.xpose.msra.mxu0 0
    %1188 = vmatprep.subr.bf16.mxu0 0
    %1189 = vmatpush1.bf16.xpose.msra.mxu0 0
    %1190 = vmatprep.mubr.bf16.mxu0 0
    %1191 = vmatmul.mubr.bf16.gmra.mrb[0].mxu0 %v1153
    %v1192 = vpop.f32.mrb[0].mxu0
    %v1193 = vadd.f32 0.0, %v1192
    %v1194 = vpop.f32.mrb[0].mxu0
    %v1195 = vpop.f32.mrb[0].mxu0
    %v1196 = vadd.f32 0.0, %v1195
    %v1197 = vpop.f32.mrb[0].mxu0
    %1198 = vdwg.mxu0
    %1200 = vrot.lane.b32.xlu0 %v1148, 96
    %v1201 = vpop.permute.xlu0 %1200
    %v1203 = vsel %vm191, %v1146, 0
    %v1206 = vsel %vm191, %v1201, 0
    %1208 = vmatprep.subr.bf16.mxu0 0
    %1209 = vmatpush1.bf16.xpose.msra.mxu0 %v1206
    %1210 = vmatprep.subr.bf16.mxu0 0
    %1211 = vmatpush1.bf16.xpose.msra.mxu0 0
    %1212 = vmatprep.subr.bf16.mxu0 0
    %1213 = vmatpush1.bf16.xpose.msra.mxu0 0
    %1214 = vmatprep.subr.bf16.mxu0 0
    %1215 = vmatpush1.bf16.xpose.msra.mxu0 0
    %1216 = vmatprep.subr.bf16.mxu0 0
    %1217 = vmatpush1.bf16.xpose.msra.mxu0 0
    %1218 = vmatprep.subr.bf16.mxu0 0
    %1219 = vmatpush1.bf16.xpose.msra.mxu0 0
    %1220 = vmatprep.subr.bf16.mxu0 0
    %1221 = vmatpush1.bf16.xpose.msra.mxu0 0
    %1222 = vmatprep.subr.bf16.mxu0 0
    %1223 = vmatpush1.bf16.xpose.msra.mxu0 0
    %1224 = vmatprep.subr.bf16.mxu0 0
    %1225 = vmatpush1.bf16.xpose.msra.mxu0 0
    %1226 = vmatprep.subr.bf16.mxu0 0
    %1227 = vmatpush1.bf16.xpose.msra.mxu0 0
    %1228 = vmatprep.subr.bf16.mxu0 0
    %1229 = vmatpush1.bf16.xpose.msra.mxu0 0
    %1230 = vmatprep.subr.bf16.mxu0 0
    %1231 = vmatpush1.bf16.xpose.msra.mxu0 0
    %1232 = vmatprep.subr.bf16.mxu0 0
    %1233 = vmatpush1.bf16.xpose.msra.mxu0 0
    %1234 = vmatprep.subr.bf16.mxu0 0
    %1235 = vmatpush1.bf16.xpose.msra.mxu0 0
    %1236 = vmatprep.subr.bf16.mxu0 0
    %1237 = vmatpush1.bf16.xpose.msra.mxu0 0
    %1238 = vmatprep.subr.bf16.mxu0 0
    %1239 = vmatpush1.bf16.xpose.msra.mxu0 0
    %1240 = vmatprep.mubr.bf16.mxu0 0
    %1241 = vmatmul.mubr.bf16.gmra.mrb[0].mxu0 %v1203
    %v1242 = vpop.f32.mrb[0].mxu0
    %v1243 = vadd.f32 0.0, %v1242
    %v1244 = vpop.f32.mrb[0].mxu0
    %v1245 = vpop.f32.mrb[0].mxu0
    %v1246 = vadd.f32 0.0, %v1245
    %v1247 = vpop.f32.mrb[0].mxu0
    %1248 = vdwg.mxu0
    %vm1249 = vcmask 130048
    %v1250 = vsel %vm1249, %v1193, -inf
    %1251 = vmax.xlane.f32.xlu0 %v1250
    %v1252 = vpop.xlane.xlu0 %1251
    %v1253 = vsel %vm1249, %v1196, -inf
    %1254 = vmax.xlane.f32.xlu0 %v1253
    %v1255 = vpop.xlane.xlu0 %1254
    %v1256 = vsel %vm1249, %v1243, -inf
    %1257 = vmax.xlane.f32.xlu0 %v1256
    %v1258 = vpop.xlane.xlu0 %1257
    %v1259 = vsel %vm1249, %v1246, -inf
    %1260 = vmax.xlane.f32.xlu0 %v1259
    %v1261 = vpop.xlane.xlu0 %1260
    %v1262 = vsub.f32 %v1193, %v1252
    %v1263 = vsub.f32 %v1196, %v1255
    %v1264 = vsub.f32 %v1243, %v1258
    %v1265 = vsub.f32 %v1246, %v1261
    %v1266 = vmul.f32 %v1262, 1.442695
    %v1267 = vpow.pop %v1266
    %v1268 = vmul.f32 %v1263, 1.442695
    %v1269 = vpow.pop %v1268
    %v1270 = vmul.f32 %v1264, 1.442695
    %v1271 = vpow.pop %v1270
    %v1272 = vmul.f32 %v1265, 1.442695
    %v1273 = vpow.pop %v1272
    %v1274 = vsel %vm1249, %v1267, 0.0
    %1275 = vadd.xlane.f32.xlu0 %v1274
    %v1276 = vpop.xlane.xlu0 %1275
    %v1277 = vsel %vm1249, %v1269, 0.0
    %1278 = vadd.xlane.f32.xlu0 %v1277
    %v1279 = vpop.xlane.xlu0 %1278
    %v1280 = vsel %vm1249, %v1271, 0.0
    %1281 = vadd.xlane.f32.xlu0 %v1280
    %v1282 = vpop.xlane.xlu0 %1281
    %v1283 = vsel %vm1249, %v1273, 0.0
    %1284 = vadd.xlane.f32.xlu0 %v1283
    %v1285 = vpop.xlane.xlu0 %1284
    %v1286 = vrcp.pop %v1276
    %v1287 = vrcp.pop %v1279
    %v1288 = vrcp.pop %v1282
    %v1289 = vrcp.pop %v1285
    %v1290 = vmul.f32 %v1267, %v1286
    %v1291 = vmul.f32 %v1269, %v1287
    %v1292 = vmul.f32 %v1271, %v1288
    %v1293 = vmul.f32 %v1273, %v1289
    %v1294 = vpack.c.bf16 %v1291, %v1290
    %v1295 = vpack.c.bf16 %v1293, %v1292
    %1296 = vrot.lane.b32.xlu0 %v1147, 64
    %v1297 = vpop.permute.xlu0 %1296
    %v1300 = vsel %vm1249, %v1294, 0
    %1302 = vmatprep.subr.bf16.mxu0 0
    %1303 = vmatpush1.bf16.msra.mxu0 %v1297
    %1304 = vmatprep.subr.bf16.mxu0 0
    %1305 = vmatpush1.bf16.msra.mxu0 0
    %1306 = vmatprep.subr.bf16.mxu0 0
    %1307 = vmatpush1.bf16.msra.mxu0 0
    %1308 = vmatprep.subr.bf16.mxu0 0
    %1309 = vmatpush1.bf16.msra.mxu0 0
    %1310 = vmatprep.subr.bf16.mxu0 0
    %1311 = vmatpush1.bf16.msra.mxu0 0
    %1312 = vmatprep.subr.bf16.mxu0 0
    %1313 = vmatpush1.bf16.msra.mxu0 0
    %1314 = vmatprep.subr.bf16.mxu0 0
    %1315 = vmatpush1.bf16.msra.mxu0 0
    %1316 = vmatprep.subr.bf16.mxu0 0
    %1317 = vmatpush1.bf16.msra.mxu0 0
    %1318 = vmatprep.subr.bf16.mxu0 0
    %1319 = vmatpush1.bf16.msra.mxu0 0
    %1320 = vmatprep.subr.bf16.mxu0 0
    %1321 = vmatpush1.bf16.msra.mxu0 0
    %1322 = vmatprep.subr.bf16.mxu0 0
    %1323 = vmatpush1.bf16.msra.mxu0 0
    %1324 = vmatprep.subr.bf16.mxu0 0
    %1325 = vmatpush1.bf16.msra.mxu0 0
    %1326 = vmatprep.subr.bf16.mxu0 0
    %1327 = vmatpush1.bf16.msra.mxu0 0
    %1328 = vmatprep.subr.bf16.mxu0 0
    %1329 = vmatpush1.bf16.msra.mxu0 0
    %1330 = vmatprep.subr.bf16.mxu0 0
    %1331 = vmatpush1.bf16.msra.mxu0 0
    %1332 = vmatprep.subr.bf16.mxu0 0
    %1333 = vmatpush1.bf16.msra.mxu0 0
    %1334 = vmatprep.mubr.bf16.mxu0 0
    %1335 = vmatmul.mubr.bf16.gmra.mrb[0].mxu0 %v1300
    %v1336 = vpop.f32.mrb[0].mxu0
    %v1337 = vadd.f32 0.0, %v1336
    %v1338 = vpop.f32.mrb[0].mxu0
    %v1339 = vpop.f32.mrb[0].mxu0
    %v1340 = vadd.f32 0.0, %v1339
    %v1341 = vpop.f32.mrb[0].mxu0
    %1342 = vdwg.mxu0
    %1343 = vrot.lane.b32.xlu0 %v1148, 64
    %v1344 = vpop.permute.xlu0 %1343
    %v1347 = vsel %vm1249, %v1295, 0
    %1349 = vmatprep.subr.bf16.mxu0 0
    %1350 = vmatpush1.bf16.msra.mxu0 %v1344
    %1351 = vmatprep.subr.bf16.mxu0 0
    %1352 = vmatpush1.bf16.msra.mxu0 0
    %1353 = vmatprep.subr.bf16.mxu0 0
    %1354 = vmatpush1.bf16.msra.mxu0 0
    %1355 = vmatprep.subr.bf16.mxu0 0
    %1356 = vmatpush1.bf16.msra.mxu0 0
    %1357 = vmatprep.subr.bf16.mxu0 0
    %1358 = vmatpush1.bf16.msra.mxu0 0
    %1359 = vmatprep.subr.bf16.mxu0 0
    %1360 = vmatpush1.bf16.msra.mxu0 0
    %1361 = vmatprep.subr.bf16.mxu0 0
    %1362 = vmatpush1.bf16.msra.mxu0 0
    %1363 = vmatprep.subr.bf16.mxu0 0
    %1364 = vmatpush1.bf16.msra.mxu0 0
    %1365 = vmatprep.subr.bf16.mxu0 0
    %1366 = vmatpush1.bf16.msra.mxu0 0
    %1367 = vmatprep.subr.bf16.mxu0 0
    %1368 = vmatpush1.bf16.msra.mxu0 0
    %1369 = vmatprep.subr.bf16.mxu0 0
    %1370 = vmatpush1.bf16.msra.mxu0 0
    %1371 = vmatprep.subr.bf16.mxu0 0
    %1372 = vmatpush1.bf16.msra.mxu0 0
    %1373 = vmatprep.subr.bf16.mxu0 0
    %1374 = vmatpush1.bf16.msra.mxu0 0
    %1375 = vmatprep.subr.bf16.mxu0 0
    %1376 = vmatpush1.bf16.msra.mxu0 0
    %1377 = vmatprep.subr.bf16.mxu0 0
    %1378 = vmatpush1.bf16.msra.mxu0 0
    %1379 = vmatprep.subr.bf16.mxu0 0
    %1380 = vmatpush1.bf16.msra.mxu0 0
    %1381 = vmatprep.mubr.bf16.mxu0 0
    %1382 = vmatmul.mubr.bf16.gmra.mrb[0].mxu0 %v1347
    %v1383 = vpop.f32.mrb[0].mxu0
    %v1384 = vadd.f32 0.0, %v1383
    %v1385 = vpop.f32.mrb[0].mxu0
    %v1386 = vpop.f32.mrb[0].mxu0
    %v1387 = vadd.f32 0.0, %v1386
    %v1388 = vpop.f32.mrb[0].mxu0
    %1389 = vdwg.mxu0
    %v1390 = vpack.c.bf16 %v1340, %v1337
    %v1391 = vpack.c.bf16 %v1387, %v1384
    %v1393 = vlaneseq
    %v1394 = vshrl.u32 %v1393, 7
    %v1395 = vsub.s32 0, %v1394
    %v1396 = vrot.slane %v977, %v1395
    %v1402 = vunpack.c.l.b16 %v973
    %v1403 = vunpack.c.l.b16 %v974
    %v1404 = vunpack.c.l.b16 %v975
    %v1405 = vunpack.c.l.b16 %v976
    %v1406 = vpack.c.b16 %v1403, %v1402
    %v1407 = vpack.c.b16 %v1405, %v1404
    %v1411 = vsel %vm191, %v1390, 0
    %v1414 = vsel %vm191, %v1391, 0
    %1416 = vmatprep.subr.bf16.mxu0 0
    %1417 = vmatpush1.bf16.msra.mxu0 %v1406
    %1418 = vmatprep.subr.bf16.mxu0 0
    %1419 = vmatpush1.bf16.msra.mxu0 %v1407
    %1420 = vmatprep.subr.bf16.mxu0 0
    %1421 = vmatpush1.bf16.msra.mxu0 0
    %1422 = vmatprep.subr.bf16.mxu0 0
    %1423 = vmatpush1.bf16.msra.mxu0 0
    %1424 = vmatprep.subr.bf16.mxu0 0
    %1425 = vmatpush1.bf16.msra.mxu0 0
    %1426 = vmatprep.subr.bf16.mxu0 0
    %1427 = vmatpush1.bf16.msra.mxu0 0
    %1428 = vmatprep.subr.bf16.mxu0 0
    %1429 = vmatpush1.bf16.msra.mxu0 0
    %1430 = vmatprep.subr.bf16.mxu0 0
    %1431 = vmatpush1.bf16.msra.mxu0 0
    %1432 = vmatprep.subr.bf16.mxu0 0
    %1433 = vmatpush1.bf16.msra.mxu0 0
    %1434 = vmatprep.subr.bf16.mxu0 0
    %1435 = vmatpush1.bf16.msra.mxu0 0
    %1436 = vmatprep.subr.bf16.mxu0 0
    %1437 = vmatpush1.bf16.msra.mxu0 0
    %1438 = vmatprep.subr.bf16.mxu0 0
    %1439 = vmatpush1.bf16.msra.mxu0 0
    %1440 = vmatprep.subr.bf16.mxu0 0
    %1441 = vmatpush1.bf16.msra.mxu0 0
    %1442 = vmatprep.subr.bf16.mxu0 0
    %1443 = vmatpush1.bf16.msra.mxu0 0
    %1444 = vmatprep.subr.bf16.mxu0 0
    %1445 = vmatpush1.bf16.msra.mxu0 0
    %1446 = vmatprep.subr.bf16.mxu0 0
    %1447 = vmatpush1.bf16.msra.mxu0 0
    %1448 = vmatprep.mubr.bf16.mxu0 0
    %1449 = vmatmul.mubr.bf16.gmra.mrb[0].mxu0 %v1411
    %v1450 = vpop.f32.mrb[0].mxu0
    %v1451 = vadd.f32 %v1396, %v1450
    %v1452 = vpop.f32.mrb[0].mxu0
    %v1453 = vpop.f32.mrb[0].mxu0
    %v1454 = vadd.f32 %v1396, %v1453
    %v1455 = vpop.f32.mrb[0].mxu0
    %1456 = vmatprep.mubr.bf16.mxu0 0
    %1457 = vmatmul.mubr.bf16.gmra.mrb[0].mxu0 %v1414
    %v1458 = vpop.f32.mrb[0].mxu0
    %v1459 = vadd.f32 %v1396, %v1458
    %v1460 = vpop.f32.mrb[0].mxu0
    %v1461 = vpop.f32.mrb[0].mxu0
    %v1462 = vadd.f32 %v1396, %v1461
    %v1463 = vpop.f32.mrb[0].mxu0
    %1464 = vdwg.mxu0
    %v1465 = vadd.f32 %v962, %v1451
    %v1466 = vadd.f32 %v963, %v1454
    %v1467 = vadd.f32 %v964, %v1459
    %v1468 = vadd.f32 %v965, %v1462
    %v1469 = vsel %vm191, %v1465, 0.0
    %1470 = vadd.xlane.f32.xlu0 %v1469
    %v1471 = vpop.xlane.xlu0 %1470
    %v1472 = vsel %vm191, %v1466, 0.0
    %1473 = vadd.xlane.f32.xlu0 %v1472
    %v1474 = vpop.xlane.xlu0 %1473
    %v1475 = vsel %vm191, %v1467, 0.0
    %1476 = vadd.xlane.f32.xlu0 %v1475
    %v1477 = vpop.xlane.xlu0 %1476
    %v1478 = vsel %vm191, %v1468, 0.0
    %1479 = vadd.xlane.f32.xlu0 %v1478
    %v1480 = vpop.xlane.xlu0 %1479
    %v1481 = vmul.f32 %v1471, %v198
    %v1482 = vmul.f32 %v1474, %v198
    %v1483 = vmul.f32 %v1477, %v198
    %v1484 = vmul.f32 %v1480, %v198
    %v1485 = vsub.f32 %v1465, %v1481
    %v1486 = vsub.f32 %v1466, %v1482
    %v1487 = vsub.f32 %v1467, %v1483
    %v1488 = vsub.f32 %v1468, %v1484
    %v1489 = vmul.f32 %v1485, %v1485
    %v1490 = vmul.f32 %v1486, %v1486
    %v1491 = vmul.f32 %v1487, %v1487
    %v1492 = vmul.f32 %v1488, %v1488
    %v1493 = vsel %vm191, %v1489, 0.0
    %1494 = vadd.xlane.f32.xlu0 %v1493
    %v1495 = vpop.xlane.xlu0 %1494
    %v1496 = vsel %vm191, %v1490, 0.0
    %1497 = vadd.xlane.f32.xlu0 %v1496
    %v1498 = vpop.xlane.xlu0 %1497
    %v1499 = vsel %vm191, %v1491, 0.0
    %1500 = vadd.xlane.f32.xlu0 %v1499
    %v1501 = vpop.xlane.xlu0 %1500
    %v1502 = vsel %vm191, %v1492, 0.0
    %1503 = vadd.xlane.f32.xlu0 %v1502
    %v1504 = vpop.xlane.xlu0 %1503
    %v1505 = vmul.f32 %v1495, %v198
    %v1506 = vmul.f32 %v1498, %v198
    %v1507 = vmul.f32 %v1501, %v198
    %v1508 = vmul.f32 %v1504, %v198
    %v1509 = vadd.f32 %v1505, 1e-05
    %v1510 = vadd.f32 %v1506, 1e-05
    %v1511 = vadd.f32 %v1507, 1e-05
    %v1512 = vadd.f32 %v1508, 1e-05
    %v1513 = vrsqrt.pop %v1509
    %v1514 = vrsqrt.pop %v1510
    %v1515 = vrsqrt.pop %v1511
    %v1516 = vrsqrt.pop %v1512
    %v1517 = vmul.f32 %v1485, %v1513
    %v1518 = vmul.f32 %v1486, %v1514
    %v1519 = vmul.f32 %v1487, %v1515
    %v1520 = vmul.f32 %v1488, %v1516
    %v1522 = vlaneseq
    %v1523 = vshrl.u32 %v1522, 7
    %v1524 = vsub.s32 0, %v1523
    %v1525 = vrot.slane %v978, %v1524
    %v1527 = vmul.f32 %v1517, %v1525
    %v1528 = vmul.f32 %v1518, %v1525
    %v1529 = vmul.f32 %v1519, %v1525
    %v1530 = vmul.f32 %v1520, %v1525
    %v1532 = vlaneseq
    %v1533 = vshrl.u32 %v1532, 7
    %v1534 = vsub.s32 0, %v1533
    %v1535 = vrot.slane %v979, %v1534
    %v1537 = vadd.f32 %v1527, %v1535
    %v1538 = vadd.f32 %v1528, %v1535
    %v1539 = vadd.f32 %v1529, %v1535
    %v1540 = vadd.f32 %v1530, %v1535
    %v1541 = vpack.c.bf16 %v1538, %v1537
    %v1542 = vpack.c.bf16 %v1540, %v1539
    %v1544 = vlaneseq
    %v1545 = vshrl.u32 %v1544, 7
    %v1546 = vsub.s32 0, %v1545
    %v1547 = vrot.slane %v984, %v1546
    %v1553 = vunpack.c.l.b16 %v980
    %v1554 = vunpack.c.l.b16 %v981
    %v1555 = vunpack.c.l.b16 %v982
    %v1556 = vunpack.c.l.b16 %v983
    %v1557 = vpack.c.b16 %v1554, %v1553
    %v1558 = vpack.c.b16 %v1556, %v1555
    %v1562 = vsel %vm191, %v1541, 0
    %v1565 = vsel %vm191, %v1542, 0
    %1567 = vmatprep.subr.bf16.mxu0 0
    %1568 = vmatpush1.bf16.msra.mxu0 %v1557
    %1569 = vmatprep.subr.bf16.mxu0 0
    %1570 = vmatpush1.bf16.msra.mxu0 %v1558
    %1571 = vmatprep.subr.bf16.mxu0 0
    %1572 = vmatpush1.bf16.msra.mxu0 0
    %1573 = vmatprep.subr.bf16.mxu0 0
    %1574 = vmatpush1.bf16.msra.mxu0 0
    %1575 = vmatprep.subr.bf16.mxu0 0
    %1576 = vmatpush1.bf16.msra.mxu0 0
    %1577 = vmatprep.subr.bf16.mxu0 0
    %1578 = vmatpush1.bf16.msra.mxu0 0
    %1579 = vmatprep.subr.bf16.mxu0 0
    %1580 = vmatpush1.bf16.msra.mxu0 0
    %1581 = vmatprep.subr.bf16.mxu0 0
    %1582 = vmatpush1.bf16.msra.mxu0 0
    %1583 = vmatprep.subr.bf16.mxu0 0
    %1584 = vmatpush1.bf16.msra.mxu0 0
    %1585 = vmatprep.subr.bf16.mxu0 0
    %1586 = vmatpush1.bf16.msra.mxu0 0
    %1587 = vmatprep.subr.bf16.mxu0 0
    %1588 = vmatpush1.bf16.msra.mxu0 0
    %1589 = vmatprep.subr.bf16.mxu0 0
    %1590 = vmatpush1.bf16.msra.mxu0 0
    %1591 = vmatprep.subr.bf16.mxu0 0
    %1592 = vmatpush1.bf16.msra.mxu0 0
    %1593 = vmatprep.subr.bf16.mxu0 0
    %1594 = vmatpush1.bf16.msra.mxu0 0
    %1595 = vmatprep.subr.bf16.mxu0 0
    %1596 = vmatpush1.bf16.msra.mxu0 0
    %1597 = vmatprep.subr.bf16.mxu0 0
    %1598 = vmatpush1.bf16.msra.mxu0 0
    %1599 = vmatprep.mubr.bf16.mxu0 0
    %1600 = vmatmul.mubr.bf16.gmra.mrb[0].mxu0 %v1562
    %v1601 = vpop.f32.mrb[0].mxu0
    %v1602 = vadd.f32 %v1547, %v1601
    %v1603 = vpop.f32.mrb[0].mxu0
    %v1604 = vpop.f32.mrb[0].mxu0
    %v1605 = vadd.f32 %v1547, %v1604
    %v1606 = vpop.f32.mrb[0].mxu0
    %1607 = vmatprep.mubr.bf16.mxu0 0
    %1608 = vmatmul.mubr.bf16.gmra.mrb[0].mxu0 %v1565
    %v1609 = vpop.f32.mrb[0].mxu0
    %v1610 = vadd.f32 %v1547, %v1609
    %v1611 = vpop.f32.mrb[0].mxu0
    %v1612 = vpop.f32.mrb[0].mxu0
    %v1613 = vadd.f32 %v1547, %v1612
    %v1614 = vpop.f32.mrb[0].mxu0
    %1615 = vdwg.mxu0
    %v1616 = vmul.f32 %v1602, %v1602
    %v1617 = vmul.f32 %v1605, %v1605
    %v1618 = vmul.f32 %v1610, %v1610
    %v1619 = vmul.f32 %v1613, %v1613
    %v1620 = vmul.f32 %v1602, %v1616
    %v1621 = vmul.f32 %v1605, %v1617
    %v1622 = vmul.f32 %v1610, %v1618
    %v1623 = vmul.f32 %v1613, %v1619
    %v1624 = vmul.f32 %v1620, 0.044715
    %v1625 = vmul.f32 %v1621, 0.044715
    %v1626 = vmul.f32 %v1622, 0.044715
    %v1627 = vmul.f32 %v1623, 0.044715
    %v1628 = vadd.f32 %v1602, %v1624
    %v1629 = vadd.f32 %v1605, %v1625
    %v1630 = vadd.f32 %v1610, %v1626
    %v1631 = vadd.f32 %v1613, %v1627
    %v1632 = vmul.f32 %v1628, 0.7978846
    %v1633 = vmul.f32 %v1629, 0.7978846
    %v1634 = vmul.f32 %v1630, 0.7978846
    %v1635 = vmul.f32 %v1631, 0.7978846
    %v1636 = vtanh.pop %v1632
    %v1637 = vtanh.pop %v1633
    %v1638 = vtanh.pop %v1634
    %v1639 = vtanh.pop %v1635
    %v1640 = vadd.f32 %v1636, 1.0
    %v1641 = vadd.f32 %v1637, 1.0
    %v1642 = vadd.f32 %v1638, 1.0
    %v1643 = vadd.f32 %v1639, 1.0
    %v1644 = vmul.f32 %v1640, 0.5
    %v1645 = vmul.f32 %v1641, 0.5
    %v1646 = vmul.f32 %v1642, 0.5
    %v1647 = vmul.f32 %v1643, 0.5
    %v1648 = vmul.f32 %v1602, %v1644
    %v1649 = vmul.f32 %v1605, %v1645
    %v1650 = vmul.f32 %v1610, %v1646
    %v1651 = vmul.f32 %v1613, %v1647
    %v1652 = vpack.c.bf16 %v1649, %v1648
    %v1653 = vpack.c.bf16 %v1651, %v1650
    %v1655 = vlaneseq
    %v1656 = vshrl.u32 %v1655, 7
    %v1657 = vsub.s32 0, %v1656
    %v1658 = vrot.slane %v993, %v1657
    %v1668 = vunpack.c.l.b16 %v985
    %v1669 = vunpack.c.l.b16 %v986
    %v1670 = vunpack.c.l.b16 %v987
    %v1671 = vunpack.c.l.b16 %v988
    %v1672 = vunpack.c.l.b16 %v989
    %v1673 = vunpack.c.l.b16 %v990
    %v1674 = vunpack.c.l.b16 %v991
    %v1675 = vunpack.c.l.b16 %v992
    %v1676 = vpack.c.b16 %v1669, %v1668
    %v1677 = vpack.c.b16 %v1671, %v1670
    %v1678 = vpack.c.b16 %v1673, %v1672
    %v1679 = vpack.c.b16 %v1675, %v1674
    %v1685 = vsel %vm743, %v1652, 0
    %v1688 = vsel %vm743, %v1653, 0
    %1690 = vmatprep.subr.bf16.mxu0 0
    %1691 = vmatpush1.bf16.msra.mxu0 %v1676
    %1692 = vmatprep.subr.bf16.mxu0 0
    %1693 = vmatpush1.bf16.msra.mxu0 %v1677
    %1694 = vmatprep.subr.bf16.mxu0 0
    %1695 = vmatpush1.bf16.msra.mxu0 %v1678
    %1696 = vmatprep.subr.bf16.mxu0 0
    %1697 = vmatpush1.bf16.msra.mxu0 %v1679
    %1698 = vmatprep.subr.bf16.mxu0 0
    %1699 = vmatpush1.bf16.msra.mxu0 0
    %1700 = vmatprep.subr.bf16.mxu0 0
    %1701 = vmatpush1.bf16.msra.mxu0 0
    %1702 = vmatprep.subr.bf16.mxu0 0
    %1703 = vmatpush1.bf16.msra.mxu0 0
    %1704 = vmatprep.subr.bf16.mxu0 0
    %1705 = vmatpush1.bf16.msra.mxu0 0
    %1706 = vmatprep.subr.bf16.mxu0 0
    %1707 = vmatpush1.bf16.msra.mxu0 0
    %1708 = vmatprep.subr.bf16.mxu0 0
    %1709 = vmatpush1.bf16.msra.mxu0 0
    %1710 = vmatprep.subr.bf16.mxu0 0
    %1711 = vmatpush1.bf16.msra.mxu0 0
    %1712 = vmatprep.subr.bf16.mxu0 0
    %1713 = vmatpush1.bf16.msra.mxu0 0
    %1714 = vmatprep.subr.bf16.mxu0 0
    %1715 = vmatpush1.bf16.msra.mxu0 0
    %1716 = vmatprep.subr.bf16.mxu0 0
    %1717 = vmatpush1.bf16.msra.mxu0 0
    %1718 = vmatprep.subr.bf16.mxu0 0
    %1719 = vmatpush1.bf16.msra.mxu0 0
    %1720 = vmatprep.subr.bf16.mxu0 0
    %1721 = vmatpush1.bf16.msra.mxu0 0
    %1722 = vmatprep.mubr.bf16.mxu0 0
    %1723 = vmatmul.mubr.bf16.gmra.mrb[0].mxu0 %v1685
    %v1724 = vpop.f32.mrb[0].mxu0
    %v1725 = vadd.f32 %v1658, %v1724
    %v1726 = vpop.f32.mrb[0].mxu0
    %v1727 = vpop.f32.mrb[0].mxu0
    %v1728 = vadd.f32 %v1658, %v1727
    %v1729 = vpop.f32.mrb[0].mxu0
    %1730 = vmatprep.mubr.bf16.mxu0 0
    %1731 = vmatmul.mubr.bf16.gmra.mrb[0].mxu0 %v1688
    %v1732 = vpop.f32.mrb[0].mxu0
    %v1733 = vadd.f32 %v1658, %v1732
    %v1734 = vpop.f32.mrb[0].mxu0
    %v1735 = vpop.f32.mrb[0].mxu0
    %v1736 = vadd.f32 %v1658, %v1735
    %v1737 = vpop.f32.mrb[0].mxu0
    %1738 = vdwg.mxu0
    %v1739 = vadd.f32 %v1465, %v1725
    %v1740 = vadd.f32 %v1466, %v1728
    %v1741 = vadd.f32 %v1467, %v1733
    %v1742 = vadd.f32 %v1468, %v1736
    %v1743 = vld [vmem:[%s65] sm:$0x1]
    %v1744 = vld [vmem:[%s67] sm:$0x1]
    %v1745 = vsel %vm191, %v1739, 0.0
    %1746 = vadd.xlane.f32.xlu0 %v1745
    %v1747 = vpop.xlane.xlu0 %1746
    %v1748 = vsel %vm191, %v1740, 0.0
    %1749 = vadd.xlane.f32.xlu0 %v1748
    %v1750 = vpop.xlane.xlu0 %1749
    %v1751 = vsel %vm191, %v1741, 0.0
    %1752 = vadd.xlane.f32.xlu0 %v1751
    %v1753 = vpop.xlane.xlu0 %1752
    %v1754 = vsel %vm191, %v1742, 0.0
    %1755 = vadd.xlane.f32.xlu0 %v1754
    %v1756 = vpop.xlane.xlu0 %1755
    %v1757 = vmul.f32 %v1747, %v198
    %v1758 = vmul.f32 %v1750, %v198
    %v1759 = vmul.f32 %v1753, %v198
    %v1760 = vmul.f32 %v1756, %v198
    %v1761 = vsub.f32 %v1739, %v1757
    %v1762 = vsub.f32 %v1740, %v1758
    %v1763 = vsub.f32 %v1741, %v1759
    %v1764 = vsub.f32 %v1742, %v1760
    %v1765 = vmul.f32 %v1761, %v1761
    %v1766 = vmul.f32 %v1762, %v1762
    %v1767 = vmul.f32 %v1763, %v1763
    %v1768 = vmul.f32 %v1764, %v1764
    %v1769 = vsel %vm191, %v1765, 0.0
    %1770 = vadd.xlane.f32.xlu0 %v1769
    %v1771 = vpop.xlane.xlu0 %1770
    %v1772 = vsel %vm191, %v1766, 0.0
    %1773 = vadd.xlane.f32.xlu0 %v1772
    %v1774 = vpop.xlane.xlu0 %1773
    %v1775 = vsel %vm191, %v1767, 0.0
    %1776 = vadd.xlane.f32.xlu0 %v1775
    %v1777 = vpop.xlane.xlu0 %1776
    %v1778 = vsel %vm191, %v1768, 0.0
    %1779 = vadd.xlane.f32.xlu0 %v1778
    %v1780 = vpop.xlane.xlu0 %1779
    %v1781 = vmul.f32 %v1771, %v198
    %v1782 = vmul.f32 %v1774, %v198
    %v1783 = vmul.f32 %v1777, %v198
    %v1784 = vmul.f32 %v1780, %v198
    %v1785 = vadd.f32 %v1781, 1e-05
    %v1786 = vadd.f32 %v1782, 1e-05
    %v1787 = vadd.f32 %v1783, 1e-05
    %v1788 = vadd.f32 %v1784, 1e-05
    %v1789 = vrsqrt.pop %v1785
    %v1790 = vrsqrt.pop %v1786
    %v1791 = vrsqrt.pop %v1787
    %v1792 = vrsqrt.pop %v1788
    %v1793 = vmul.f32 %v1761, %v1789
    %v1794 = vmul.f32 %v1762, %v1790
    %v1795 = vmul.f32 %v1763, %v1791
    %v1796 = vmul.f32 %v1764, %v1792
    %v1798 = vlaneseq
    %v1799 = vshrl.u32 %v1798, 7
    %v1800 = vsub.s32 0, %v1799
    %v1801 = vrot.slane %v1743, %v1800
    %v1803 = vmul.f32 %v1793, %v1801
    %v1804 = vmul.f32 %v1794, %v1801
    %v1805 = vmul.f32 %v1795, %v1801
    %v1806 = vmul.f32 %v1796, %v1801
    %v1808 = vlaneseq
    %v1809 = vshrl.u32 %v1808, 7
    %v1810 = vsub.s32 0, %v1809
    %v1811 = vrot.slane %v1744, %v1810
    %v1813 = vadd.f32 %v1803, %v1811
    %v1814 = vadd.f32 %v1804, %v1811
    %v1815 = vadd.f32 %v1805, %v1811
    %v1816 = vadd.f32 %v1806, %v1811
    %v1817 = vsel %vm191, %v1813, 0.0
    %v1818 = vsel %vm191, %v1814, 0.0
    %v1819 = vadd.f32 %v1817, %v1818
    %v1820 = vrot.slane %v1819, 4
    %v1821 = vadd.f32 %v1819, %v1820
    %v1822 = vrot.slane %v1821, 2
    %v1823 = vadd.f32 %v1821, %v1822
    %v1824 = vrot.slane %v1823, 1
    %v1825 = vadd.f32 %v1823, %v1824
    %v1826 = vsel %vm191, %v1815, 0.0
    %v1827 = vsel %vm191, %v1816, 0.0
    %v1828 = vadd.f32 %v1826, %v1827
    %v1829 = vrot.slane %v1828, 4
    %v1830 = vadd.f32 %v1828, %v1829
    %v1831 = vrot.slane %v1830, 2
    %v1832 = vadd.f32 %v1830, %v1831
    %v1833 = vrot.slane %v1832, 1
    %v1834 = vadd.f32 %v1832, %v1833
    %v1835 = vrcp.pop 16.0
    %v1836 = vmul.f32 %v1825, %v1835
    %v1837 = vmul.f32 %v1834, %v1835
    %v1838 = vld [vmem:[%s69] sm:$0xf]
    %v1839 = vld [vmem:[%s69 + $0x4] sm:$0xf]
    %v1840 = vld [vmem:[%s69 + $0x8] sm:$0xf]
    %v1841 = vld [vmem:[%s69 + $0xc] sm:$0xf]
    %v1842 = vpack.c.bf16 %v1836, %v1836
    %v1843 = vpack.c.bf16 %v1837, %v1837
    %v1844 = vld [vmem:[%s71] sm:$0xf]
    %v1845 = vld [vmem:[%s71 + $0x4] sm:$0xf]
    %v1846 = vld [vmem:[%s71 + $0x8] sm:$0xf]
    %v1847 = vld [vmem:[%s71 + $0xc] sm:$0xf]
    %v1848 = vpack.c.bf16 %v866, %v866
    %v1853 = vunpack.c.l.b16 %v1844
    %v1854 = vunpack.c.l.b16 %v1845
    %v1855 = vunpack.c.l.b16 %v1846
    %v1856 = vunpack.c.l.b16 %v1847
    %v1857 = vpack.c.b16 %v1854, %v1853
    %v1858 = vpack.c.b16 %v1856, %v1855
    %v1862 = vsel %vm191, %v1848, 0
    %1864 = vmatprep.subr.bf16.mxu0 0
    %1865 = vmatpush1.bf16.msra.mxu0 %v1857
    %1866 = vmatprep.subr.bf16.mxu0 0
    %1867 = vmatpush1.bf16.msra.mxu0 %v1858
    %1868 = vmatprep.subr.bf16.mxu0 0
    %1869 = vmatpush1.bf16.msra.mxu0 0
    %1870 = vmatprep.subr.bf16.mxu0 0
    %1871 = vmatpush1.bf16.msra.mxu0 0
    %1872 = vmatprep.subr.bf16.mxu0 0
    %1873 = vmatpush1.bf16.msra.mxu0 0
    %1874 = vmatprep.subr.bf16.mxu0 0
    %1875 = vmatpush1.bf16.msra.mxu0 0
    %1876 = vmatprep.subr.bf16.mxu0 0
    %1877 = vmatpush1.bf16.msra.mxu0 0
    %1878 = vmatprep.subr.bf16.mxu0 0
    %1879 = vmatpush1.bf16.msra.mxu0 0
    %1880 = vmatprep.subr.bf16.mxu0 0
    %1881 = vmatpush1.bf16.msra.mxu0 0
    %1882 = vmatprep.subr.bf16.mxu0 0
    %1883 = vmatpush1.bf16.msra.mxu0 0
    %1884 = vmatprep.subr.bf16.mxu0 0
    %1885 = vmatpush1.bf16.msra.mxu0 0
    %1886 = vmatprep.subr.bf16.mxu0 0
    %1887 = vmatpush1.bf16.msra.mxu0 0
    %1888 = vmatprep.subr.bf16.mxu0 0
    %1889 = vmatpush1.bf16.msra.mxu0 0
    %1890 = vmatprep.subr.bf16.mxu0 0
    %1891 = vmatpush1.bf16.msra.mxu0 0
    %1892 = vmatprep.subr.bf16.mxu0 0
    %1893 = vmatpush1.bf16.msra.mxu0 0
    %1894 = vmatprep.subr.bf16.mxu0 0
    %1895 = vmatpush1.bf16.msra.mxu0 0
    %1896 = vmatprep.mubr.bf16.mxu0 0
    %1897 = vmatmul.mubr.bf16.gmra.mrb[0].mxu0 %v1862
    %v1898 = vpop.f32.mrb[0].mxu0
    %v1899 = vadd.f32 0.0, %v1898
    %v1900 = vpop.f32.mrb[0].mxu0
    %v1901 = vpop.f32.mrb[0].mxu0
    %v1902 = vpop.f32.mrb[0].mxu0
    %1903 = vdwg.mxu0
    %v1906 = vunpack.c.l.b16 %v1842
    %v1907 = vunpack.c.l.b16 %v1843
    %v1908 = vsel %vm808, %v1907, %v1906
    %v1909 = vpack.c.b16 %v1908, %v1908
    %v1914 = vunpack.c.l.b16 %v1838
    %v1915 = vunpack.c.l.b16 %v1839
    %v1916 = vunpack.c.l.b16 %v1840
    %v1917 = vunpack.c.l.b16 %v1841
    %v1918 = vpack.c.b16 %v1915, %v1914
    %v1919 = vpack.c.b16 %v1917, %v1916
    %v1923 = vsel %vm191, %v1909, 0
    %1925 = vmatprep.subr.bf16.mxu0 0
    %1926 = vmatpush1.bf16.msra.mxu0 %v1918
    %1927 = vmatprep.subr.bf16.mxu0 0
    %1928 = vmatpush1.bf16.msra.mxu0 %v1919
    %1929 = vmatprep.subr.bf16.mxu0 0
    %1930 = vmatpush1.bf16.msra.mxu0 0
    %1931 = vmatprep.subr.bf16.mxu0 0
    %1932 = vmatpush1.bf16.msra.mxu0 0
    %1933 = vmatprep.subr.bf16.mxu0 0
    %1934 = vmatpush1.bf16.msra.mxu0 0
    %1935 = vmatprep.subr.bf16.mxu0 0
    %1936 = vmatpush1.bf16.msra.mxu0 0
    %1937 = vmatprep.subr.bf16.mxu0 0
    %1938 = vmatpush1.bf16.msra.mxu0 0
    %1939 = vmatprep.subr.bf16.mxu0 0
    %1940 = vmatpush1.bf16.msra.mxu0 0
    %1941 = vmatprep.subr.bf16.mxu0 0
    %1942 = vmatpush1.bf16.msra.mxu0 0
    %1943 = vmatprep.subr.bf16.mxu0 0
    %1944 = vmatpush1.bf16.msra.mxu0 0
    %1945 = vmatprep.subr.bf16.mxu0 0
    %1946 = vmatpush1.bf16.msra.mxu0 0
    %1947 = vmatprep.subr.bf16.mxu0 0
    %1948 = vmatpush1.bf16.msra.mxu0 0
    %1949 = vmatprep.subr.bf16.mxu0 0
    %1950 = vmatpush1.bf16.msra.mxu0 0
    %1951 = vmatprep.subr.bf16.mxu0 0
    %1952 = vmatpush1.bf16.msra.mxu0 0
    %1953 = vmatprep.subr.bf16.mxu0 0
    %1954 = vmatpush1.bf16.msra.mxu0 0
    %1955 = vmatprep.subr.bf16.mxu0 0
    %1956 = vmatpush1.bf16.msra.mxu0 0
    %1957 = vmatprep.mubr.bf16.mxu0 0
    %1958 = vmatmul.mubr.bf16.gmra.mrb[0].mxu0 %v1923
    %v1959 = vpop.f32.mrb[0].mxu0
    %v1960 = vadd.f32 %v1899, %v1959
    %v1961 = vpop.f32.mrb[0].mxu0
    %v1962 = vpop.f32.mrb[0].mxu0
    %v1963 = vpop.f32.mrb[0].mxu0
    %1964 = vdwg.mxu0
    %v1965 = vld [vmem:[%s73] sm:$0x1]
    %v1967 = vlaneseq
    %v1968 = vshrl.u32 %v1967, 7
    %v1969 = vsub.s32 0, %v1968
    %v1970 = vrot.slane %v1965, %v1969
    %v1972 = vadd.f32 %v1960, %v1970
    %vm1973 = vcmask 74752
    %1974 = vst.msk [vmem:[#allocation2] sm:$0x3] %vm1973, %v1972
    // Predicated region
    $region150: #{vqa_forward.1} parent=1 // pred_check
      _
    $region151: #{vqa_forward.1} parent=1 // pred_check_branch
      %1976 = sbr.rel (0) target = $region153
    $region152: #{vqa_forward.1} parent=1 // pred_region
      %s1978 = ssub.s32 32, 32
      %1979 = vsyncadd [#allocation3], %s1978
      %s1981 = sshll.u32 [#allocation2], 4
      %s1982 = int_to_ptr.vmem [resolvable:$true] %s1981
      %1984 = dma.vmem_to_hbm [thread:$0]  %s1982, 32, %s75, [#allocation3]
    $region153: #{vqa_forward.1} parent=1 // pred_fallthru
      _
    // Predicated region
    $region154: #{vqa_forward.1} parent=1 // pred_check
      _
    $region155: #{vqa_forward.1} parent=1 // pred_check_branch
      %1986 = sbr.rel (0) target = $region157
    $region156: #{vqa_forward.1} parent=1 // pred_region
      %1987 = dma.done [#allocation3], 32
    $region157: #{vqa_forward.1} parent=1 // pred_fallthru
      _
    %1988 = vsyncpa [#allocation3], 1

</llo_original>
